<compile_context>
chip_gen: v7x
topology: tpu7x:2x2x1
jax: 0.10.0
libtpu: 0.0.40
codegen_flags: <defaults>
</compile_context>

<pallas_src>
import functools

import jax
import jax.numpy as jnp
from jax import lax
from jax.experimental import pallas as pl
from jax.experimental.pallas import tpu as pltpu


# ----------------------------------------------------------------------------
# Fused LightGCN kernel: propagation + layer-mean + gather + BPR loss
# ----------------------------------------------------------------------------
def _lightgcn_kernel(u_idx_ref, i_idx_ref, j_idx_ref,   # VMEM (B, 1) int32
                     r_ref,                              # VMEM (U, I) bf16
                     ue_tab_ref, ie_tab_ref,             # VMEM (U, D)/(I, D) f32
                     loss_ref,                           # VMEM (1, 1) f32 output
                     *, n_layers, reg, batch):
    U = ue_tab_ref.shape[0]
    I = ie_tab_ref.shape[0]
    B = batch

    # --- one-hot selection matrices (exact 0/1 in f32) ------------------------
    u_cols = lax.broadcasted_iota(jnp.int32, (B, U), 1)
    i_cols = lax.broadcasted_iota(jnp.int32, (B, I), 1)
    oh_u = (u_cols == u_idx_ref[...]).astype(jnp.float32)   # (B, U)
    oh_p = (i_cols == i_idx_ref[...]).astype(jnp.float32)   # (B, I)
    oh_n = (i_cols == j_idx_ref[...]).astype(jnp.float32)   # (B, I)

    # --- layer 0 contribution: gathered ego-embedding rows --------------------
    acc_u = jnp.dot(oh_u, ue_tab_ref[...], preferred_element_type=jnp.float32)
    acc_p = jnp.dot(oh_p, ie_tab_ref[...], preferred_element_type=jnp.float32)
    acc_n = jnp.dot(oh_n, ie_tab_ref[...], preferred_element_type=jnp.float32)

    # bf16 MXU inputs for layer 1 (single cast of the f32 ego tables)
    u_in = ue_tab_ref[...].astype(jnp.bfloat16)    # (U, D)
    i_in = ie_tab_ref[...].astype(jnp.bfloat16)    # (I, D)

    # --- propagation: user <- R @ item ; item <- R^T @ user -------------------
    for layer in range(n_layers):
        new_u = jnp.dot(r_ref[...], i_in,
                        preferred_element_type=jnp.float32)          # (U, D) f32
        new_i = lax.dot_general(r_ref[...], u_in,
                                dimension_numbers=(((0,), (0,)), ((), ())),
                                preferred_element_type=jnp.float32)  # (I, D) f32

        # accumulate only the B gathered rows (one-hot MXU gather, f32)
        acc_u = acc_u + jnp.dot(oh_u, new_u, preferred_element_type=jnp.float32)
        acc_p = acc_p + jnp.dot(oh_p, new_i, preferred_element_type=jnp.float32)
        acc_n = acc_n + jnp.dot(oh_n, new_i, preferred_element_type=jnp.float32)

        if layer + 1 < n_layers:
            u_in = new_u.astype(jnp.bfloat16)
            i_in = new_i.astype(jnp.bfloat16)

    # mean over (n_layers + 1) layers, folded into the gathered rows
    scale = 1.0 / float(n_layers + 1)
    u_g = acc_u * scale
    p_g = acc_p * scale
    n_g = acc_n * scale

    # --- BPR loss --------------------------------------------------------------
    y_ui = jnp.sum(u_g * p_g, axis=1, keepdims=True)   # (B, 1)
    y_uj = jnp.sum(u_g * n_g, axis=1, keepdims=True)   # (B, 1)
    diff = y_ui - y_uj
    # numerically stable log(sigmoid(x)) = min(x, 0) - log(1 + exp(-|x|))
    log_sig = jnp.minimum(diff, 0.0) - jnp.log(1.0 + jnp.exp(-jnp.abs(diff)))
    loss = -jnp.sum(log_sig, keepdims=True) / float(B)  # (1, 1)

    if reg > 0.0:
        l2 = (jnp.sum(u_g * u_g, keepdims=True)
              + jnp.sum(p_g * p_g, keepdims=True)
              + jnp.sum(n_g * n_g, keepdims=True)) * (0.5 / float(B))
        loss = loss + reg * l2

    loss_ref[...] = loss


def lightgcn_forward(r_norm, user_emb, item_emb, u, i, j, *, n_layers, reg):
    """r_norm: (U, I) normalized interaction block of the NGCF adjacency."""
    U, D = user_emb.shape
    I = item_emb.shape[0]
    B = u.shape[0]

    # bf16 adjacency halves HBM bytes of the dominant tensor; MXU accumulates f32.
    r_bf = r_norm.astype(jnp.bfloat16)

    # (B, 1) int32 index columns (lane-broadcast against iota inside the kernel)
    u2 = u.astype(jnp.int32).reshape(B, 1)
    i2 = i.astype(jnp.int32).reshape(B, 1)
    j2 = j.astype(jnp.int32).reshape(B, 1)

    kernel = functools.partial(_lightgcn_kernel,
                               n_layers=int(n_layers),
                               reg=float(reg),
                               batch=int(B))

    # VMEM resident-set estimate (explicit limit matters on v7x's 64 MiB VMEM)
    est_bytes = (U * I * 2                      # R (bf16)
                 + (U + I) * D * 4              # ego embedding tables (f32 inputs)
                 + (U + I) * D * (2 + 4)        # bf16 layer inputs + f32 layer outputs
                 + B * (U + 2 * I) * 4          # one-hot selection matrices
                 + 6 * B * D * 4)               # row accumulators / temporaries
    vmem_limit = int(min(max(2 * est_bytes, 16 * 1024 * 1024), 96 * 1024 * 1024))

    loss = pl.pallas_call(
        kernel,
        out_shape=jax.ShapeDtypeStruct((1, 1), jnp.float32),
        in_specs=[pl.BlockSpec(memory_space=pltpu.MemorySpace.VMEM),   # u idx
                  pl.BlockSpec(memory_space=pltpu.MemorySpace.VMEM),   # i idx
                  pl.BlockSpec(memory_space=pltpu.MemorySpace.VMEM),   # j idx
                  pl.BlockSpec(memory_space=pltpu.MemorySpace.VMEM),   # R (bf16)
                  pl.BlockSpec(memory_space=pltpu.MemorySpace.VMEM),   # user_emb
                  pl.BlockSpec(memory_space=pltpu.MemorySpace.VMEM)],  # item_emb
        out_specs=pl.BlockSpec(memory_space=pltpu.MemorySpace.VMEM),
        compiler_params=pltpu.CompilerParams(vmem_limit_bytes=vmem_limit),
    )(u2, i2, j2, r_bf, user_emb, item_emb)

    return loss[0, 0]


# ----------------------------------------------------------------------------
# Parameter / graph construction (deterministic, synthetic)
# ----------------------------------------------------------------------------
def xavier_uniform(key, fan_in, fan_out):
    bound = jnp.sqrt(6.0 / (fan_in + fan_out))
    return jax.random.uniform(key, (fan_in, fan_out),
                              minval=-bound, maxval=bound, dtype=jnp.float32)


def build_norm_interaction(key, n_users, n_items, density=0.05):
    """Normalized interaction block  D_u^-1/2 R D_i^-1/2  of the NGCF adjacency.

    The full normalized adjacency is [[0, Rn], [Rn^T, 0]]; only Rn is needed.
    """
    r = jax.random.bernoulli(key, density, (n_users, n_items)).astype(jnp.float32)
    deg_u = jnp.sum(r, axis=1)
    deg_i = jnp.sum(r, axis=0)
    du = jnp.where(deg_u > 0, 1.0 / jnp.sqrt(jnp.maximum(deg_u, 1e-12)), 0.0)
    di = jnp.where(deg_i > 0, 1.0 / jnp.sqrt(jnp.maximum(deg_i, 1e-12)), 0.0)
    return du[:, None] * r * di[None, :]


if __name__ == "__main__":
    # small, tile-friendly sizes (multiples of 8 / 128 on the last two dims)
    n_users, n_items, emb_dim = 128, 256, 128
    n_layers = 3
    reg = 0.01
    batch = 8

    key = jax.random.PRNGKey(0)
    k_graph, k_user, k_item, k_u, k_i, k_j = jax.random.split(key, 6)

    r_norm = build_norm_interaction(k_graph, n_users, n_items)
    user_emb = xavier_uniform(k_user, n_users, emb_dim)
    item_emb = xavier_uniform(k_item, n_items, emb_dim)

    u = jax.random.randint(k_u, (batch,), 0, n_users, dtype=jnp.int32)
    i = jax.random.randint(k_i, (batch,), 0, n_items, dtype=jnp.int32)
    j = jax.random.randint(k_j, (batch,), 0, n_items, dtype=jnp.int32)

    loss = lightgcn_forward(r_norm, user_emb, item_emb, u, i, j,
                            n_layers=n_layers, reg=reg)
    jax.block_until_ready(loss)

    # ------------------------------------------------------------------------
    # Reference check in plain JAX.
    #   ref(True)  : same bf16-matmul-input / f32-accumulation path -> tight
    #   ref(False) : pure f32 (original module semantics) -> loose tolerance
    # ------------------------------------------------------------------------
    def ref_loss(bf16_matmul):
        rm = r_norm.astype(jnp.bfloat16) if bf16_matmul else r_norm
        rtm = r_norm.T.astype(jnp.bfloat16) if bf16_matmul else r_norm.T
        cur_u, cur_i = user_emb, item_emb
        acc_u, acc_i = user_emb, item_emb
        for _ in range(n_layers):
            li = cur_i.astype(jnp.bfloat16) if bf16_matmul else cur_i
            lu = cur_u.astype(jnp.bfloat16) if bf16_matmul else cur_u
            nu = jnp.dot(rm, li, preferred_element_type=jnp.float32)
            ni = jnp.dot(rtm, lu, preferred_element_type=jnp.float32)
            cur_u, cur_i = nu, ni
            acc_u = acc_u + nu
            acc_i = acc_i + ni
        fu = acc_u / float(n_layers + 1)
        fi = acc_i / float(n_layers + 1)
        ue, pe, ne = fu[u], fi[i], fi[j]
        y_ui = jnp.sum(ue * pe, axis=1)
        y_uj = jnp.sum(ue * ne, axis=1)
        l = -jnp.mean(jax.nn.log_sigmoid(y_ui - y_uj))
        if reg > 0.0:
            l2 = (jnp.sum(ue ** 2) / 2 + jnp.sum(pe ** 2) / 2
                  + jnp.sum(ne ** 2) / 2) / batch
            l = l + reg * l2
        return l

    ref_bf16 = ref_loss(True)
    ref_f32 = ref_loss(False)
    assert jnp.allclose(loss, ref_bf16, rtol=5e-3, atol=5e-4), (loss, ref_bf16)
    assert jnp.allclose(loss, ref_f32, rtol=1.5e-2, atol=2e-3), (loss, ref_f32)

    print("KERNEL_OK")
</pallas_src>

<mosaic_0001>
module attributes {stable_mosaic.version = 11 : i64} {
  func.func @_lightgcn_kernel(%arg0: memref<8x1xi32, #tpu.memory_space<vmem>>, %arg1: memref<8x1xi32, #tpu.memory_space<vmem>>, %arg2: memref<8x1xi32, #tpu.memory_space<vmem>>, %arg3: memref<128x256xbf16, #tpu.memory_space<vmem>>, %arg4: memref<128x128xf32, #tpu.memory_space<vmem>>, %arg5: memref<256x128xf32, #tpu.memory_space<vmem>>, %arg6: memref<1x1xf32, #tpu.memory_space<vmem>>) attributes {dimension_semantics = [], scalar_prefetch = 0 : i64, scratch_operands = 0 : i64, tpu.core_type = #tpu.core_type<tc>} {
    %0 = tpu.iota {dimensions = array<i32: 1>} : vector<8x128xi32>
    %1 = tpu.iota {dimensions = array<i32: 1>} : vector<8x256xi32>
    %c0 = arith.constant 0 : index
    %c0_0 = arith.constant 0 : index
    %2 = vector.load %arg0[%c0, %c0_0] : memref<8x1xi32, #tpu.memory_space<vmem>>, vector<8x1xi32>
    %3 = vector.broadcast %2 : vector<8x1xi32> to vector<8x128xi32>
    %4 = arith.cmpi eq, %0, %3 : vector<8x128xi32>
    %5 = arith.extui %4 : vector<8x128xi1> to vector<8x128xi32>
    %6 = arith.sitofp %5 : vector<8x128xi32> to vector<8x128xf32>
    %c0_1 = arith.constant 0 : index
    %c0_2 = arith.constant 0 : index
    %7 = vector.load %arg1[%c0_1, %c0_2] : memref<8x1xi32, #tpu.memory_space<vmem>>, vector<8x1xi32>
    %8 = vector.broadcast %7 : vector<8x1xi32> to vector<8x256xi32>
    %9 = arith.cmpi eq, %1, %8 : vector<8x256xi32>
    %10 = arith.extui %9 : vector<8x256xi1> to vector<8x256xi32>
    %11 = arith.sitofp %10 : vector<8x256xi32> to vector<8x256xf32>
    %c0_3 = arith.constant 0 : index
    %c0_4 = arith.constant 0 : index
    %12 = vector.load %arg2[%c0_3, %c0_4] : memref<8x1xi32, #tpu.memory_space<vmem>>, vector<8x1xi32>
    %13 = vector.broadcast %12 : vector<8x1xi32> to vector<8x256xi32>
    %14 = arith.cmpi eq, %1, %13 : vector<8x256xi32>
    %15 = arith.extui %14 : vector<8x256xi1> to vector<8x256xi32>
    %16 = arith.sitofp %15 : vector<8x256xi32> to vector<8x256xf32>
    %c0_5 = arith.constant 0 : index
    %c0_6 = arith.constant 0 : index
    %17 = vector.load %arg4[%c0_5, %c0_6] : memref<128x128xf32, #tpu.memory_space<vmem>>, vector<128x128xf32>
    %cst = arith.constant dense<0.000000e+00> : vector<8x128xf32>
    %18 = tpu.matmul %6, %17, %cst {dimension_numbers = #tpu.dot_dimension_numbers<[1], [0], [0], [1], [0, 0, 1, 1], [], []>} : vector<8x128xf32>, vector<128x128xf32>, vector<8x128xf32> -> vector<8x128xf32>
    %c0_7 = arith.constant 0 : index
    %c0_8 = arith.constant 0 : index
    %19 = vector.load %arg5[%c0_7, %c0_8] : memref<256x128xf32, #tpu.memory_space<vmem>>, vector<256x128xf32>
    %cst_9 = arith.constant dense<0.000000e+00> : vector<8x128xf32>
    %20 = tpu.matmul %11, %19, %cst_9 {dimension_numbers = #tpu.dot_dimension_numbers<[1], [0], [0], [1], [0, 0, 1, 1], [], []>} : vector<8x256xf32>, vector<256x128xf32>, vector<8x128xf32> -> vector<8x128xf32>
    %c0_10 = arith.constant 0 : index
    %c0_11 = arith.constant 0 : index
    %21 = vector.load %arg5[%c0_10, %c0_11] : memref<256x128xf32, #tpu.memory_space<vmem>>, vector<256x128xf32>
    %cst_12 = arith.constant dense<0.000000e+00> : vector<8x128xf32>
    %22 = tpu.matmul %16, %21, %cst_12 {dimension_numbers = #tpu.dot_dimension_numbers<[1], [0], [0], [1], [0, 0, 1, 1], [], []>} : vector<8x256xf32>, vector<256x128xf32>, vector<8x128xf32> -> vector<8x128xf32>
    %c0_13 = arith.constant 0 : index
    %c0_14 = arith.constant 0 : index
    %23 = vector.load %arg4[%c0_13, %c0_14] : memref<128x128xf32, #tpu.memory_space<vmem>>, vector<128x128xf32>
    %24 = arith.truncf %23 : vector<128x128xf32> to vector<128x128xbf16>
    %c0_15 = arith.constant 0 : index
    %c0_16 = arith.constant 0 : index
    %25 = vector.load %arg5[%c0_15, %c0_16] : memref<256x128xf32, #tpu.memory_space<vmem>>, vector<256x128xf32>
    %26 = arith.truncf %25 : vector<256x128xf32> to vector<256x128xbf16>
    %c0_17 = arith.constant 0 : index
    %c0_18 = arith.constant 0 : index
    %27 = vector.load %arg3[%c0_17, %c0_18] : memref<128x256xbf16, #tpu.memory_space<vmem>>, vector<128x256xbf16>
    %cst_19 = arith.constant dense<0.000000e+00> : vector<128x128xf32>
    %28 = tpu.matmul %27, %26, %cst_19 {dimension_numbers = #tpu.dot_dimension_numbers<[1], [0], [0], [1], [0, 0, 1, 1], [], []>} : vector<128x256xbf16>, vector<256x128xbf16>, vector<128x128xf32> -> vector<128x128xf32>
    %c0_20 = arith.constant 0 : index
    %c0_21 = arith.constant 0 : index
    %29 = vector.load %arg3[%c0_20, %c0_21] : memref<128x256xbf16, #tpu.memory_space<vmem>>, vector<128x256xbf16>
    %cst_22 = arith.constant dense<0.000000e+00> : vector<256x128xf32>
    %30 = tpu.matmul %29, %24, %cst_22 {dimension_numbers = #tpu.dot_dimension_numbers<[0], [0], [1], [1], [0, 1, 1, 1], [], []>} : vector<128x256xbf16>, vector<128x128xbf16>, vector<256x128xf32> -> vector<256x128xf32>
    %cst_23 = arith.constant dense<0.000000e+00> : vector<8x128xf32>
    %31 = tpu.matmul %6, %28, %cst_23 {dimension_numbers = #tpu.dot_dimension_numbers<[1], [0], [0], [1], [0, 0, 1, 1], [], []>} : vector<8x128xf32>, vector<128x128xf32>, vector<8x128xf32> -> vector<8x128xf32>
    %32 = arith.addf %18, %31 : vector<8x128xf32>
    %cst_24 = arith.constant dense<0.000000e+00> : vector<8x128xf32>
    %33 = tpu.matmul %11, %30, %cst_24 {dimension_numbers = #tpu.dot_dimension_numbers<[1], [0], [0], [1], [0, 0, 1, 1], [], []>} : vector<8x256xf32>, vector<256x128xf32>, vector<8x128xf32> -> vector<8x128xf32>
    %34 = arith.addf %20, %33 : vector<8x128xf32>
    %cst_25 = arith.constant dense<0.000000e+00> : vector<8x128xf32>
    %35 = tpu.matmul %16, %30, %cst_25 {dimension_numbers = #tpu.dot_dimension_numbers<[1], [0], [0], [1], [0, 0, 1, 1], [], []>} : vector<8x256xf32>, vector<256x128xf32>, vector<8x128xf32> -> vector<8x128xf32>
    %36 = arith.addf %22, %35 : vector<8x128xf32>
    %37 = arith.truncf %28 : vector<128x128xf32> to vector<128x128xbf16>
    %38 = arith.truncf %30 : vector<256x128xf32> to vector<256x128xbf16>
    %c0_26 = arith.constant 0 : index
    %c0_27 = arith.constant 0 : index
    %39 = vector.load %arg3[%c0_26, %c0_27] : memref<128x256xbf16, #tpu.memory_space<vmem>>, vector<128x256xbf16>
    %cst_28 = arith.constant dense<0.000000e+00> : vector<128x128xf32>
    %40 = tpu.matmul %39, %38, %cst_28 {dimension_numbers = #tpu.dot_dimension_numbers<[1], [0], [0], [1], [0, 0, 1, 1], [], []>} : vector<128x256xbf16>, vector<256x128xbf16>, vector<128x128xf32> -> vector<128x128xf32>
    %c0_29 = arith.constant 0 : index
    %c0_30 = arith.constant 0 : index
    %41 = vector.load %arg3[%c0_29, %c0_30] : memref<128x256xbf16, #tpu.memory_space<vmem>>, vector<128x256xbf16>
    %cst_31 = arith.constant dense<0.000000e+00> : vector<256x128xf32>
    %42 = tpu.matmul %41, %37, %cst_31 {dimension_numbers = #tpu.dot_dimension_numbers<[0], [0], [1], [1], [0, 1, 1, 1], [], []>} : vector<128x256xbf16>, vector<128x128xbf16>, vector<256x128xf32> -> vector<256x128xf32>
    %cst_32 = arith.constant dense<0.000000e+00> : vector<8x128xf32>
    %43 = tpu.matmul %6, %40, %cst_32 {dimension_numbers = #tpu.dot_dimension_numbers<[1], [0], [0], [1], [0, 0, 1, 1], [], []>} : vector<8x128xf32>, vector<128x128xf32>, vector<8x128xf32> -> vector<8x128xf32>
    %44 = arith.addf %32, %43 : vector<8x128xf32>
    %cst_33 = arith.constant dense<0.000000e+00> : vector<8x128xf32>
    %45 = tpu.matmul %11, %42, %cst_33 {dimension_numbers = #tpu.dot_dimension_numbers<[1], [0], [0], [1], [0, 0, 1, 1], [], []>} : vector<8x256xf32>, vector<256x128xf32>, vector<8x128xf32> -> vector<8x128xf32>
    %46 = arith.addf %34, %45 : vector<8x128xf32>
    %cst_34 = arith.constant dense<0.000000e+00> : vector<8x128xf32>
    %47 = tpu.matmul %16, %42, %cst_34 {dimension_numbers = #tpu.dot_dimension_numbers<[1], [0], [0], [1], [0, 0, 1, 1], [], []>} : vector<8x256xf32>, vector<256x128xf32>, vector<8x128xf32> -> vector<8x128xf32>
    %48 = arith.addf %36, %47 : vector<8x128xf32>
    %49 = arith.truncf %40 : vector<128x128xf32> to vector<128x128xbf16>
    %50 = arith.truncf %42 : vector<256x128xf32> to vector<256x128xbf16>
    %c0_35 = arith.constant 0 : index
    %c0_36 = arith.constant 0 : index
    %51 = vector.load %arg3[%c0_35, %c0_36] : memref<128x256xbf16, #tpu.memory_space<vmem>>, vector<128x256xbf16>
    %cst_37 = arith.constant dense<0.000000e+00> : vector<128x128xf32>
    %52 = tpu.matmul %51, %50, %cst_37 {dimension_numbers = #tpu.dot_dimension_numbers<[1], [0], [0], [1], [0, 0, 1, 1], [], []>} : vector<128x256xbf16>, vector<256x128xbf16>, vector<128x128xf32> -> vector<128x128xf32>
    %c0_38 = arith.constant 0 : index
    %c0_39 = arith.constant 0 : index
    %53 = vector.load %arg3[%c0_38, %c0_39] : memref<128x256xbf16, #tpu.memory_space<vmem>>, vector<128x256xbf16>
    %cst_40 = arith.constant dense<0.000000e+00> : vector<256x128xf32>
    %54 = tpu.matmul %53, %49, %cst_40 {dimension_numbers = #tpu.dot_dimension_numbers<[0], [0], [1], [1], [0, 1, 1, 1], [], []>} : vector<128x256xbf16>, vector<128x128xbf16>, vector<256x128xf32> -> vector<256x128xf32>
    %cst_41 = arith.constant dense<0.000000e+00> : vector<8x128xf32>
    %55 = tpu.matmul %6, %52, %cst_41 {dimension_numbers = #tpu.dot_dimension_numbers<[1], [0], [0], [1], [0, 0, 1, 1], [], []>} : vector<8x128xf32>, vector<128x128xf32>, vector<8x128xf32> -> vector<8x128xf32>
    %56 = arith.addf %44, %55 : vector<8x128xf32>
    %cst_42 = arith.constant dense<0.000000e+00> : vector<8x128xf32>
    %57 = tpu.matmul %11, %54, %cst_42 {dimension_numbers = #tpu.dot_dimension_numbers<[1], [0], [0], [1], [0, 0, 1, 1], [], []>} : vector<8x256xf32>, vector<256x128xf32>, vector<8x128xf32> -> vector<8x128xf32>
    %58 = arith.addf %46, %57 : vector<8x128xf32>
    %cst_43 = arith.constant dense<0.000000e+00> : vector<8x128xf32>
    %59 = tpu.matmul %16, %54, %cst_43 {dimension_numbers = #tpu.dot_dimension_numbers<[1], [0], [0], [1], [0, 0, 1, 1], [], []>} : vector<8x256xf32>, vector<256x128xf32>, vector<8x128xf32> -> vector<8x128xf32>
    %60 = arith.addf %48, %59 : vector<8x128xf32>
    %cst_44 = arith.constant 2.500000e-01 : f32
    %61 = vector.broadcast %cst_44 : f32 to vector<8x128xf32>
    %62 = arith.mulf %56, %61 : vector<8x128xf32>
    %cst_45 = arith.constant 2.500000e-01 : f32
    %63 = vector.broadcast %cst_45 : f32 to vector<8x128xf32>
    %64 = arith.mulf %58, %63 : vector<8x128xf32>
    %cst_46 = arith.constant 2.500000e-01 : f32
    %65 = vector.broadcast %cst_46 : f32 to vector<8x128xf32>
    %66 = arith.mulf %60, %65 : vector<8x128xf32>
    %67 = arith.mulf %62, %64 : vector<8x128xf32>
    %cst_47 = arith.constant dense<0.000000e+00> : vector<8xf32>
    %68 = vector.multi_reduction <add>, %67, %cst_47 [1] : vector<8x128xf32> to vector<8xf32>
    %69 = vector.shape_cast %68 : vector<8xf32> to vector<8x1xf32>
    %70 = arith.mulf %62, %66 : vector<8x128xf32>
    %cst_48 = arith.constant dense<0.000000e+00> : vector<8xf32>
    %71 = vector.multi_reduction <add>, %70, %cst_48 [1] : vector<8x128xf32> to vector<8xf32>
    %72 = vector.shape_cast %71 : vector<8xf32> to vector<8x1xf32>
    %73 = arith.subf %69, %72 : vector<8x1xf32>
    %cst_49 = arith.constant 0.000000e+00 : f32
    %74 = vector.broadcast %cst_49 : f32 to vector<8x1xf32>
    %75 = arith.minimumf %73, %74 : vector<8x1xf32>
    %76 = math.absf %73 : vector<8x1xf32>
    %cst_50 = arith.constant 0.000000e+00 : f32
    %77 = vector.broadcast %cst_50 : f32 to vector<8x1xf32>
    %78 = arith.subf %77, %76 : vector<8x1xf32>
    %79 = math.exp %78 : vector<8x1xf32>
    %cst_51 = arith.constant 1.000000e+00 : f32
    %80 = vector.broadcast %cst_51 : f32 to vector<8x1xf32>
    %81 = arith.addf %80, %79 : vector<8x1xf32>
    %82 = math.log %81 : vector<8x1xf32>
    %83 = arith.subf %75, %82 : vector<8x1xf32>
    %84 = vector.shape_cast %83 : vector<8x1xf32> to vector<1x8x1xf32>
    %cst_52 = arith.constant dense<0.000000e+00> : vector<1xf32>
    %85 = vector.multi_reduction <add>, %84, %cst_52 [1, 2] : vector<1x8x1xf32> to vector<1xf32>
    %86 = vector.shape_cast %85 : vector<1xf32> to vector<1x1x1xf32>
    %87 = vector.extract %86[0, 0, 0] : f32 from vector<1x1x1xf32>
    %88 = vector.broadcast %87 : f32 to vector<1x1xf32>
    %cst_53 = arith.constant 0.000000e+00 : f32
    %89 = vector.broadcast %cst_53 : f32 to vector<1x1xf32>
    %90 = arith.subf %89, %88 : vector<1x1xf32>
    %cst_54 = arith.constant 8.000000e+00 : f32
    %91 = vector.broadcast %cst_54 : f32 to vector<1x1xf32>
    %92 = arith.divf %90, %91 : vector<1x1xf32>
    %93 = arith.mulf %62, %62 : vector<8x128xf32>
    %94 = vector.shape_cast %93 : vector<8x128xf32> to vector<1x8x128xf32>
    %cst_55 = arith.constant dense<0.000000e+00> : vector<1xf32>
    %95 = vector.multi_reduction <add>, %94, %cst_55 [1, 2] : vector<1x8x128xf32> to vector<1xf32>
    %96 = vector.shape_cast %95 : vector<1xf32> to vector<1x1x1xf32>
    %97 = vector.extract %96[0, 0, 0] : f32 from vector<1x1x1xf32>
    %98 = vector.broadcast %97 : f32 to vector<1x1xf32>
    %99 = arith.mulf %64, %64 : vector<8x128xf32>
    %100 = vector.shape_cast %99 : vector<8x128xf32> to vector<1x8x128xf32>
    %cst_56 = arith.constant dense<0.000000e+00> : vector<1xf32>
    %101 = vector.multi_reduction <add>, %100, %cst_56 [1, 2] : vector<1x8x128xf32> to vector<1xf32>
    %102 = vector.shape_cast %101 : vector<1xf32> to vector<1x1x1xf32>
    %103 = vector.extract %102[0, 0, 0] : f32 from vector<1x1x1xf32>
    %104 = vector.broadcast %103 : f32 to vector<1x1xf32>
    %105 = arith.addf %98, %104 : vector<1x1xf32>
    %106 = arith.mulf %66, %66 : vector<8x128xf32>
    %107 = vector.shape_cast %106 : vector<8x128xf32> to vector<1x8x128xf32>
    %cst_57 = arith.constant dense<0.000000e+00> : vector<1xf32>
    %108 = vector.multi_reduction <add>, %107, %cst_57 [1, 2] : vector<1x8x128xf32> to vector<1xf32>
    %109 = vector.shape_cast %108 : vector<1xf32> to vector<1x1x1xf32>
    %110 = vector.extract %109[0, 0, 0] : f32 from vector<1x1x1xf32>
    %111 = vector.broadcast %110 : f32 to vector<1x1xf32>
    %112 = arith.addf %105, %111 : vector<1x1xf32>
    %cst_58 = arith.constant 6.250000e-02 : f32
    %113 = vector.broadcast %cst_58 : f32 to vector<1x1xf32>
    %114 = arith.mulf %112, %113 : vector<1x1xf32>
    %cst_59 = arith.constant 0.00999999977 : f32
    %115 = vector.broadcast %cst_59 : f32 to vector<1x1xf32>
    %116 = arith.mulf %115, %114 : vector<1x1xf32>
    %117 = arith.addf %92, %116 : vector<1x1xf32>
    %c0_60 = arith.constant 0 : index
    %c0_61 = arith.constant 0 : index
    %118 = vector.load %arg6[%c0_60, %c0_61] : memref<1x1xf32, #tpu.memory_space<vmem>>, vector<1x1xf32>
    tpu.vector_store %arg6[%c0_60, %c0_61], %117 {strides = array<i32>} : memref<1x1xf32, #tpu.memory_space<vmem>>, vector<1x1xf32>,
    return
  }
}

</mosaic_0001>

<llo_original>
// kernel: tpu_custom_call.1
$region0: #{tpu_custom_call.1}
  #allocation0 [shape = 'u32[]', space=smem, size = 0x4, offset = 0x4, fixed_abs, tag = 'smem constant byte address 0x4 - core index']
  #allocation1 [shape = 'u32[144,128]{1,0:T(1,128)}', space=vmem, size = 0x12000, scoped, tag = 'internal scratch']
  %s0 = inlined_call_operand.vmem [shape: s32[8,1], index: 0, kind: input, shape index: {}]
  %s1 = inlined_call_operand.vmem [shape: s32[8,1], index: 1, kind: input, shape index: {}]
  %s2 = inlined_call_operand.vmem [shape: s32[8,1], index: 2, kind: input, shape index: {}]
  %s3 = inlined_call_operand.hbm [shape: bf16[128,256], index: 3, kind: input, shape index: {}]
  %s4 = inlined_call_operand.hbm [shape: f32[128,128], index: 4, kind: input, shape index: {}]
  %s5 = inlined_call_operand.hbm [shape: f32[256,128], index: 5, kind: input, shape index: {}]
  %s6 = inlined_call_operand.hbm [shape: f32[1,1], index: 6, kind: output, shape index: {}]
  %s7 = sld [smem:[#allocation0]]
  $region46: #{tpu_custom_call.1} parent=0
    _
  %s9 = ssub.s32 1, %s7
  %s10 = scalar_select 0, %s9, %s7
  $region1: #{tpu_custom_call.1} parent=0
    #allocation2 [shape = 'u8[65536]{0}', space=vmem, size = 0x10000, scoped, tag = 'input window, operand 3, single buffered']
    #allocation3 [shape = 's32[1]{0}', space=sflag, size = 0x4, scoped, tag = 'scoped memory for tpu_custom_call.1']
    #allocation4 [shape = 's32[1]{0}', space=sflag, size = 0x4, scoped, tag = 'scoped memory for tpu_custom_call.1']
    #allocation5 [shape = 'u8[65536]{0}', space=vmem, size = 0x10000, scoped, tag = 'input window, operand 4, single buffered']
    #allocation6 [shape = 's32[1]{0}', space=sflag, size = 0x4, scoped, tag = 'scoped memory for tpu_custom_call.1']
    #allocation7 [shape = 'u8[131072]{0}', space=vmem, size = 0x20000, scoped, tag = 'input window, operand 5, single buffered']
    #allocation8 [shape = 'u8[512]{0}', space=vmem, size = 0x400, scoped, tag = 'output window, operand 0, single buffered']
    %11 = vsyncpa [#allocation3], 0
    %12 = vsyncpa [#allocation6], 0
    %13 = vsyncpa [#allocation4], 0
    // Predicated region
    $region2: #{tpu_custom_call.1} parent=1 // pred_check
      _
    $region3: #{tpu_custom_call.1} parent=1 // pred_check_branch
      %15 = sbr.rel (0) target = $region5
    $region4: #{tpu_custom_call.1} parent=1 // pred_region
      _
    $region5: #{tpu_custom_call.1} parent=1 // pred_fallthru
      _
    // Predicated region
    $region6: #{tpu_custom_call.1} parent=1 // pred_check
      _
    $region7: #{tpu_custom_call.1} parent=1 // pred_check_branch
      %17 = sbr.rel (0) target = $region9
    $region8: #{tpu_custom_call.1} parent=1 // pred_region
      _
    $region9: #{tpu_custom_call.1} parent=1 // pred_fallthru
      _
    // Predicated region
    $region10: #{tpu_custom_call.1} parent=1 // pred_check
      _
    $region11: #{tpu_custom_call.1} parent=1 // pred_check_branch
      %19 = sbr.rel (0) target = $region13
    $region12: #{tpu_custom_call.1} parent=1 // pred_region
      _
    $region13: #{tpu_custom_call.1} parent=1 // pred_fallthru
      _
    // Predicated region
    $region14: #{tpu_custom_call.1} parent=1 // pred_check
      _
    $region15: #{tpu_custom_call.1} parent=1 // pred_check_branch
      %21 = sbr.rel (0) target = $region17
    $region16: #{tpu_custom_call.1} parent=1 // pred_region
      %s23 = ssub.s32 2048, 2048
      %24 = vsyncadd [#allocation3], %s23
      %s25 = sshll.u32 [#allocation2], 4
      %s26 = int_to_ptr.vmem [resolvable:$true] %s25
      %31 = dma.hbm_to_vmem [thread:$0]  %s3, 2048, %s26, [#allocation3], 128, 128, 8
    $region17: #{tpu_custom_call.1} parent=1 // pred_fallthru
      _
    // Predicated region
    $region18: #{tpu_custom_call.1} parent=1 // pred_check
      _
    $region19: #{tpu_custom_call.1} parent=1 // pred_check_branch
      %33 = sbr.rel (0) target = $region21
    $region20: #{tpu_custom_call.1} parent=1 // pred_region
      %s35 = ssub.s32 2048, 2048
      %36 = vsyncadd [#allocation6], %s35
      %s37 = sshll.u32 [#allocation5], 4
      %s38 = int_to_ptr.vmem [resolvable:$true] %s37
      %43 = dma.hbm_to_vmem [thread:$0]  %s4, 2048, %s38, [#allocation6], 128, 128, 8
    $region21: #{tpu_custom_call.1} parent=1 // pred_fallthru
      _
    // Predicated region
    $region22: #{tpu_custom_call.1} parent=1 // pred_check
      _
    $region23: #{tpu_custom_call.1} parent=1 // pred_check_branch
      %45 = sbr.rel (0) target = $region25
    $region24: #{tpu_custom_call.1} parent=1 // pred_region
      %s47 = ssub.s32 4096, 4096
      %48 = vsyncadd [#allocation6], %s47
      %s49 = sshll.u32 [#allocation7], 4
      %s50 = int_to_ptr.vmem [resolvable:$true] %s49
      %55 = dma.hbm_to_vmem [thread:$0]  %s5, 4096, %s50, [#allocation6], 128, 128, 8
    $region25: #{tpu_custom_call.1} parent=1 // pred_fallthru
      _
    // Predicated region
    $region26: #{tpu_custom_call.1} parent=1 // pred_check
      _
    $region27: #{tpu_custom_call.1} parent=1 // pred_check_branch
      %57 = sbr.rel (0) target = $region29
    $region28: #{tpu_custom_call.1} parent=1 // pred_region
      %58 = dma.done [#allocation3], 2048
    $region29: #{tpu_custom_call.1} parent=1 // pred_fallthru
      _
    // Predicated region
    $region30: #{tpu_custom_call.1} parent=1 // pred_check
      _
    $region31: #{tpu_custom_call.1} parent=1 // pred_check_branch
      %60 = sbr.rel (0) target = $region33
    $region32: #{tpu_custom_call.1} parent=1 // pred_region
      %61 = dma.done [#allocation6], 2048
    $region33: #{tpu_custom_call.1} parent=1 // pred_fallthru
      _
    // Predicated region
    $region34: #{tpu_custom_call.1} parent=1 // pred_check
      _
    $region35: #{tpu_custom_call.1} parent=1 // pred_check_branch
      %63 = sbr.rel (0) target = $region37
    $region36: #{tpu_custom_call.1} parent=1 // pred_region
      %64 = dma.done [#allocation6], 4096
    $region37: #{tpu_custom_call.1} parent=1 // pred_fallthru
      _
    %v66 = vlaneseq
    %v67 = vand.u32 %v66, 127
    %v68 = vadd.s32 %v67, 128
    %v69 = vld [vmem:[%s0] sm:$0xff]
    %70 = vset.pattern.permute.xlu0 0
    %71 = vperm.xlu0 %70, %v69
    %v72 = vpop.permute.xlu0 %71
    %vm73 = vcmp.eq.s32.totalorder %v67, %v72
    %v74 = vsel %vm73, 1, 0
    %v75 = vcvt.s32.f32 %v74
    %v76 = vld [vmem:[%s1] sm:$0xff]
    %77 = vset.pattern.permute.xlu0 0
    %78 = vperm.xlu0 %77, %v76
    %v79 = vpop.permute.xlu0 %78
    %vm80 = vcmp.eq.s32.totalorder %v67, %v79
    %vm81 = vcmp.eq.s32.totalorder %v68, %v79
    %v82 = vsel %vm80, 1, 0
    %v83 = vsel %vm81, 1, 0
    %v84 = vcvt.s32.f32 %v82
    %v85 = vcvt.s32.f32 %v83
    %v86 = vld [vmem:[%s2] sm:$0xff]
    %87 = vset.pattern.permute.xlu0 0
    %88 = vperm.xlu0 %87, %v86
    %v89 = vpop.permute.xlu0 %88
    %vm90 = vcmp.eq.s32.totalorder %v67, %v89
    %vm91 = vcmp.eq.s32.totalorder %v68, %v89
    %v92 = vsel %vm90, 1, 0
    %v93 = vsel %vm91, 1, 0
    %v94 = vcvt.s32.f32 %v92
    %v95 = vcvt.s32.f32 %v93
    %v96 = vld [vmem:[#allocation5] sm:$0xff]
    %v97 = vld [vmem:[#allocation5 + $0x8] sm:$0xff]
    %v98 = vld [vmem:[#allocation5 + $0x10] sm:$0xff]
    %v99 = vld [vmem:[#allocation5 + $0x18] sm:$0xff]
    %v100 = vld [vmem:[#allocation5 + $0x20] sm:$0xff]
    %v101 = vld [vmem:[#allocation5 + $0x28] sm:$0xff]
    %v102 = vld [vmem:[#allocation5 + $0x30] sm:$0xff]
    %v103 = vld [vmem:[#allocation5 + $0x38] sm:$0xff]
    %v104 = vld [vmem:[#allocation5 + $0x40] sm:$0xff]
    %v105 = vld [vmem:[#allocation5 + $0x48] sm:$0xff]
    %v106 = vld [vmem:[#allocation5 + $0x50] sm:$0xff]
    %v107 = vld [vmem:[#allocation5 + $0x58] sm:$0xff]
    %v108 = vld [vmem:[#allocation5 + $0x60] sm:$0xff]
    %v109 = vld [vmem:[#allocation5 + $0x68] sm:$0xff]
    %v110 = vld [vmem:[#allocation5 + $0x70] sm:$0xff]
    %v111 = vld [vmem:[#allocation5 + $0x78] sm:$0xff]
    %v112 = vld [vmem:[#allocation7] sm:$0xff]
    %v113 = vld [vmem:[#allocation7 + $0x8] sm:$0xff]
    %v114 = vld [vmem:[#allocation7 + $0x10] sm:$0xff]
    %v115 = vld [vmem:[#allocation7 + $0x18] sm:$0xff]
    %v116 = vld [vmem:[#allocation7 + $0x20] sm:$0xff]
    %v117 = vld [vmem:[#allocation7 + $0x28] sm:$0xff]
    %v118 = vld [vmem:[#allocation7 + $0x30] sm:$0xff]
    %v119 = vld [vmem:[#allocation7 + $0x38] sm:$0xff]
    %v120 = vld [vmem:[#allocation7 + $0x40] sm:$0xff]
    %v121 = vld [vmem:[#allocation7 + $0x48] sm:$0xff]
    %v122 = vld [vmem:[#allocation7 + $0x50] sm:$0xff]
    %v123 = vld [vmem:[#allocation7 + $0x58] sm:$0xff]
    %v124 = vld [vmem:[#allocation7 + $0x60] sm:$0xff]
    %v125 = vld [vmem:[#allocation7 + $0x68] sm:$0xff]
    %v126 = vld [vmem:[#allocation7 + $0x70] sm:$0xff]
    %v127 = vld [vmem:[#allocation7 + $0x78] sm:$0xff]
    %v128 = vld [vmem:[#allocation7 + $0x80] sm:$0xff]
    %v129 = vld [vmem:[#allocation7 + $0x88] sm:$0xff]
    %v130 = vld [vmem:[#allocation7 + $0x90] sm:$0xff]
    %v131 = vld [vmem:[#allocation7 + $0x98] sm:$0xff]
    %v132 = vld [vmem:[#allocation7 + $0xa0] sm:$0xff]
    %v133 = vld [vmem:[#allocation7 + $0xa8] sm:$0xff]
    %v134 = vld [vmem:[#allocation7 + $0xb0] sm:$0xff]
    %v135 = vld [vmem:[#allocation7 + $0xb8] sm:$0xff]
    %v136 = vld [vmem:[#allocation7 + $0xc0] sm:$0xff]
    %v137 = vld [vmem:[#allocation7 + $0xc8] sm:$0xff]
    %v138 = vld [vmem:[#allocation7 + $0xd0] sm:$0xff]
    %v139 = vld [vmem:[#allocation7 + $0xd8] sm:$0xff]
    %v140 = vld [vmem:[#allocation7 + $0xe0] sm:$0xff]
    %v141 = vld [vmem:[#allocation7 + $0xe8] sm:$0xff]
    %v142 = vld [vmem:[#allocation7 + $0xf0] sm:$0xff]
    %v143 = vld [vmem:[#allocation7 + $0xf8] sm:$0xff]
    %v144 = vpack.c.bf16 %v97, %v96
    %v145 = vpack.c.bf16 %v99, %v98
    %v146 = vpack.c.bf16 %v101, %v100
    %v147 = vpack.c.bf16 %v103, %v102
    %v148 = vpack.c.bf16 %v105, %v104
    %v149 = vpack.c.bf16 %v107, %v106
    %v150 = vpack.c.bf16 %v109, %v108
    %v151 = vpack.c.bf16 %v111, %v110
    %v152 = vpack.c.bf16 %v113, %v112
    %v153 = vpack.c.bf16 %v115, %v114
    %v154 = vpack.c.bf16 %v117, %v116
    %v155 = vpack.c.bf16 %v119, %v118
    %v156 = vpack.c.bf16 %v121, %v120
    %v157 = vpack.c.bf16 %v123, %v122
    %v158 = vpack.c.bf16 %v125, %v124
    %v159 = vpack.c.bf16 %v127, %v126
    %v160 = vpack.c.bf16 %v129, %v128
    %v161 = vpack.c.bf16 %v131, %v130
    %v162 = vpack.c.bf16 %v133, %v132
    %v163 = vpack.c.bf16 %v135, %v134
    %v164 = vpack.c.bf16 %v137, %v136
    %v165 = vpack.c.bf16 %v139, %v138
    %v166 = vpack.c.bf16 %v141, %v140
    %v167 = vpack.c.bf16 %v143, %v142
    %v168 = vld [vmem:[#allocation2] sm:$0xff]
    %v169 = vld [vmem:[#allocation2 + $0x8] sm:$0xff]
    %v170 = vld [vmem:[#allocation2 + $0x10] sm:$0xff]
    %v171 = vld [vmem:[#allocation2 + $0x18] sm:$0xff]
    %v172 = vld [vmem:[#allocation2 + $0x20] sm:$0xff]
    %v173 = vld [vmem:[#allocation2 + $0x28] sm:$0xff]
    %v174 = vld [vmem:[#allocation2 + $0x30] sm:$0xff]
    %v175 = vld [vmem:[#allocation2 + $0x38] sm:$0xff]
    %v176 = vld [vmem:[#allocation2 + $0x40] sm:$0xff]
    %v177 = vld [vmem:[#allocation2 + $0x48] sm:$0xff]
    %v178 = vld [vmem:[#allocation2 + $0x50] sm:$0xff]
    %v179 = vld [vmem:[#allocation2 + $0x58] sm:$0xff]
    %v180 = vld [vmem:[#allocation2 + $0x60] sm:$0xff]
    %v181 = vld [vmem:[#allocation2 + $0x68] sm:$0xff]
    %v182 = vld [vmem:[#allocation2 + $0x70] sm:$0xff]
    %v183 = vld [vmem:[#allocation2 + $0x78] sm:$0xff]
    %v200 = vunpack.c.l.b16 %v168
    %v201 = vunpack.c.h.b16 %v168
    %v202 = vunpack.c.l.b16 %v169
    %v203 = vunpack.c.h.b16 %v169
    %v204 = vunpack.c.l.b16 %v170
    %v205 = vunpack.c.h.b16 %v170
    %v206 = vunpack.c.l.b16 %v171
    %v207 = vunpack.c.h.b16 %v171
    %v208 = vunpack.c.l.b16 %v172
    %v209 = vunpack.c.h.b16 %v172
    %v210 = vunpack.c.l.b16 %v173
    %v211 = vunpack.c.h.b16 %v173
    %v212 = vunpack.c.l.b16 %v174
    %v213 = vunpack.c.h.b16 %v174
    %v214 = vunpack.c.l.b16 %v175
    %v215 = vunpack.c.h.b16 %v175
    %v216 = vunpack.c.l.b16 %v176
    %v217 = vunpack.c.h.b16 %v176
    %v218 = vunpack.c.l.b16 %v177
    %v219 = vunpack.c.h.b16 %v177
    %v220 = vunpack.c.l.b16 %v178
    %v221 = vunpack.c.h.b16 %v178
    %v222 = vunpack.c.l.b16 %v179
    %v223 = vunpack.c.h.b16 %v179
    %v224 = vunpack.c.l.b16 %v180
    %v225 = vunpack.c.h.b16 %v180
    %v226 = vunpack.c.l.b16 %v181
    %v227 = vunpack.c.h.b16 %v181
    %v228 = vunpack.c.l.b16 %v182
    %v229 = vunpack.c.h.b16 %v182
    %v230 = vunpack.c.l.b16 %v183
    %v231 = vunpack.c.h.b16 %v183
    %v232 = vpack.c.b16 %v202, %v200
    %v233 = vpack.c.b16 %v203, %v201
    %v234 = vpack.c.b16 %v206, %v204
    %v235 = vpack.c.b16 %v207, %v205
    %v236 = vpack.c.b16 %v210, %v208
    %v237 = vpack.c.b16 %v211, %v209
    %v238 = vpack.c.b16 %v214, %v212
    %v239 = vpack.c.b16 %v215, %v213
    %v240 = vpack.c.b16 %v218, %v216
    %v241 = vpack.c.b16 %v219, %v217
    %v242 = vpack.c.b16 %v222, %v220
    %v243 = vpack.c.b16 %v223, %v221
    %v244 = vpack.c.b16 %v226, %v224
    %v245 = vpack.c.b16 %v227, %v225
    %v246 = vpack.c.b16 %v230, %v228
    %v247 = vpack.c.b16 %v231, %v229
    %264 = vmatprep.subr.bf16.mxu0 0
    %265 = vmatpush1.bf16.msra.mxu0 %v152
    %266 = vmatprep.subr.bf16.mxu0 0
    %267 = vmatpush1.bf16.msra.mxu0 %v153
    %268 = vmatprep.subr.bf16.mxu0 0
    %269 = vmatpush1.bf16.msra.mxu0 %v154
    %270 = vmatprep.subr.bf16.mxu0 0
    %271 = vmatpush1.bf16.msra.mxu0 %v155
    %272 = vmatprep.subr.bf16.mxu0 0
    %273 = vmatpush1.bf16.msra.mxu0 %v156
    %274 = vmatprep.subr.bf16.mxu0 0
    %275 = vmatpush1.bf16.msra.mxu0 %v157
    %276 = vmatprep.subr.bf16.mxu0 0
    %277 = vmatpush1.bf16.msra.mxu0 %v158
    %278 = vmatprep.subr.bf16.mxu0 0
    %279 = vmatpush1.bf16.msra.mxu0 %v159
    %280 = vmatprep.subr.bf16.mxu0 0
    %281 = vmatpush1.bf16.msra.mxu0 %v160
    %282 = vmatprep.subr.bf16.mxu0 0
    %283 = vmatpush1.bf16.msra.mxu0 %v161
    %284 = vmatprep.subr.bf16.mxu0 0
    %285 = vmatpush1.bf16.msra.mxu0 %v162
    %286 = vmatprep.subr.bf16.mxu0 0
    %287 = vmatpush1.bf16.msra.mxu0 %v163
    %288 = vmatprep.subr.bf16.mxu0 0
    %289 = vmatpush1.bf16.msra.mxu0 %v164
    %290 = vmatprep.subr.bf16.mxu0 0
    %291 = vmatpush1.bf16.msra.mxu0 %v165
    %292 = vmatprep.subr.bf16.mxu0 0
    %293 = vmatpush1.bf16.msra.mxu0 %v166
    %294 = vmatprep.subr.bf16.mxu0 0
    %295 = vmatpush1.bf16.msra.mxu0 %v167
    %296 = vmatprep.mubr.bf16.mxu0 %v233
    %297 = vmatmul.mubr.bf16.gmra.mrb[0].mxu0 %v232
    %v298 = vpop.f32.mrb[0].mxu0
    %v299 = vadd.f32 0.0, %v298
    %v300 = vpop.f32.mrb[0].mxu0
    %v301 = vpop.f32.mrb[0].mxu0
    %v302 = vadd.f32 0.0, %v301
    %v303 = vpop.f32.mrb[0].mxu0
    %304 = vmatprep.mubr.bf16.mxu0 %v235
    %305 = vmatmul.mubr.bf16.gmra.mrb[0].mxu0 %v234
    %v306 = vpop.f32.mrb[0].mxu0
    %v307 = vadd.f32 0.0, %v306
    %v308 = vpop.f32.mrb[0].mxu0
    %v309 = vpop.f32.mrb[0].mxu0
    %v310 = vadd.f32 0.0, %v309
    %v311 = vpop.f32.mrb[0].mxu0
    %312 = vmatprep.mubr.bf16.mxu0 %v237
    %313 = vmatmul.mubr.bf16.gmra.mrb[0].mxu0 %v236
    %v314 = vpop.f32.mrb[0].mxu0
    %v315 = vadd.f32 0.0, %v314
    %v316 = vpop.f32.mrb[0].mxu0
    %v317 = vpop.f32.mrb[0].mxu0
    %v318 = vadd.f32 0.0, %v317
    %v319 = vpop.f32.mrb[0].mxu0
    %320 = vmatprep.mubr.bf16.mxu0 %v239
    %321 = vmatmul.mubr.bf16.gmra.mrb[0].mxu0 %v238
    %v322 = vpop.f32.mrb[0].mxu0
    %v323 = vadd.f32 0.0, %v322
    %v324 = vpop.f32.mrb[0].mxu0
    %v325 = vpop.f32.mrb[0].mxu0
    %v326 = vadd.f32 0.0, %v325
    %v327 = vpop.f32.mrb[0].mxu0
    %328 = vmatprep.mubr.bf16.mxu0 %v241
    %329 = vmatmul.mubr.bf16.gmra.mrb[0].mxu0 %v240
    %v330 = vpop.f32.mrb[0].mxu0
    %v331 = vadd.f32 0.0, %v330
    %v332 = vpop.f32.mrb[0].mxu0
    %v333 = vpop.f32.mrb[0].mxu0
    %v334 = vadd.f32 0.0, %v333
    %v335 = vpop.f32.mrb[0].mxu0
    %336 = vmatprep.mubr.bf16.mxu0 %v243
    %337 = vmatmul.mubr.bf16.gmra.mrb[0].mxu0 %v242
    %v338 = vpop.f32.mrb[0].mxu0
    %v339 = vadd.f32 0.0, %v338
    %v340 = vpop.f32.mrb[0].mxu0
    %v341 = vpop.f32.mrb[0].mxu0
    %v342 = vadd.f32 0.0, %v341
    %v343 = vpop.f32.mrb[0].mxu0
    %344 = vmatprep.mubr.bf16.mxu0 %v245
    %345 = vmatmul.mubr.bf16.gmra.mrb[0].mxu0 %v244
    %v346 = vpop.f32.mrb[0].mxu0
    %v347 = vadd.f32 0.0, %v346
    %v348 = vpop.f32.mrb[0].mxu0
    %v349 = vpop.f32.mrb[0].mxu0
    %v350 = vadd.f32 0.0, %v349
    %v351 = vpop.f32.mrb[0].mxu0
    %352 = vmatprep.mubr.bf16.mxu0 %v247
    %353 = vmatmul.mubr.bf16.gmra.mrb[0].mxu0 %v246
    %v354 = vpop.f32.mrb[0].mxu0
    %v355 = vadd.f32 0.0, %v354
    %v356 = vpop.f32.mrb[0].mxu0
    %v357 = vpop.f32.mrb[0].mxu0
    %v358 = vadd.f32 0.0, %v357
    %v359 = vpop.f32.mrb[0].mxu0
    %360 = vdwg.mxu0
    %361 = vxpose.xlu0.c.b16.start [1/8] %v232, 128
    %362 = vxpose.xlu0.c.b16.cont [2/8] %v234, 128
    %363 = vxpose.xlu0.c.b16.cont [3/8] %v236, 128
    %364 = vxpose.xlu0.c.b16.cont [4/8] %v238, 128
    %365 = vxpose.xlu0.c.b16.cont [5/8] %v240, 128
    %366 = vxpose.xlu0.c.b16.cont [6/8] %v242, 128
    %367 = vxpose.xlu0.c.b16.cont [7/8] %v244, 128
    %368 = vxpose.xlu0.c.b16.end [8/8] %v246, 128
    %v369 = vpop.trf.xlu0
    %v370 = vpop.trf.xlu0
    %v371 = vpop.trf.xlu0
    %v372 = vpop.trf.xlu0
    %v373 = vpop.trf.xlu0
    %v374 = vpop.trf.xlu0
    %v375 = vpop.trf.xlu0
    %v376 = vpop.trf.xlu0
    %377 = vxpose.xlu0.c.b16.start [1/8] %v233, 128
    %378 = vxpose.xlu0.c.b16.cont [2/8] %v235, 128
    %379 = vxpose.xlu0.c.b16.cont [3/8] %v237, 128
    %380 = vxpose.xlu0.c.b16.cont [4/8] %v239, 128
    %381 = vxpose.xlu0.c.b16.cont [5/8] %v241, 128
    %382 = vxpose.xlu0.c.b16.cont [6/8] %v243, 128
    %383 = vxpose.xlu0.c.b16.cont [7/8] %v245, 128
    %384 = vxpose.xlu0.c.b16.end [8/8] %v247, 128
    %v385 = vpop.trf.xlu0
    %v386 = vpop.trf.xlu0
    %v387 = vpop.trf.xlu0
    %v388 = vpop.trf.xlu0
    %v389 = vpop.trf.xlu0
    %v390 = vpop.trf.xlu0
    %v391 = vpop.trf.xlu0
    %v392 = vpop.trf.xlu0
    %393 = vmatprep.subr.bf16.mxu0 0
    %394 = vmatpush1.bf16.msra.mxu0 %v144
    %395 = vmatprep.subr.bf16.mxu0 0
    %396 = vmatpush1.bf16.msra.mxu0 %v145
    %397 = vmatprep.subr.bf16.mxu0 0
    %398 = vmatpush1.bf16.msra.mxu0 %v146
    %399 = vmatprep.subr.bf16.mxu0 0
    %400 = vmatpush1.bf16.msra.mxu0 %v147
    %401 = vmatprep.subr.bf16.mxu0 0
    %402 = vmatpush1.bf16.msra.mxu0 %v148
    %403 = vmatprep.subr.bf16.mxu0 0
    %404 = vmatpush1.bf16.msra.mxu0 %v149
    %405 = vmatprep.subr.bf16.mxu0 0
    %406 = vmatpush1.bf16.msra.mxu0 %v150
    %407 = vmatprep.subr.bf16.mxu0 0
    %408 = vmatpush1.bf16.msra.mxu0 %v151
    %409 = vmatprep.subr.bf16.mxu0 0
    %410 = vmatpush1.bf16.msra.mxu0 0
    %411 = vmatprep.subr.bf16.mxu0 0
    %412 = vmatpush1.bf16.msra.mxu0 0
    %413 = vmatprep.subr.bf16.mxu0 0
    %414 = vmatpush1.bf16.msra.mxu0 0
    %415 = vmatprep.subr.bf16.mxu0 0
    %416 = vmatpush1.bf16.msra.mxu0 0
    %417 = vmatprep.subr.bf16.mxu0 0
    %418 = vmatpush1.bf16.msra.mxu0 0
    %419 = vmatprep.subr.bf16.mxu0 0
    %420 = vmatpush1.bf16.msra.mxu0 0
    %421 = vmatprep.subr.bf16.mxu0 0
    %422 = vmatpush1.bf16.msra.mxu0 0
    %423 = vmatprep.subr.bf16.mxu0 0
    %424 = vmatpush1.bf16.msra.mxu0 0
    %425 = vmatprep.mubr.bf16.mxu0 0
    %426 = vmatmul.mubr.bf16.gmra.mrb[0].mxu0 %v369
    %v427 = vpop.f32.mrb[0].mxu0
    %v428 = vadd.f32 0.0, %v427
    %v429 = vpop.f32.mrb[0].mxu0
    %v430 = vpop.f32.mrb[0].mxu0
    %v431 = vadd.f32 0.0, %v430
    %v432 = vpop.f32.mrb[0].mxu0
    %433 = vmatprep.mubr.bf16.mxu0 0
    %434 = vmatmul.mubr.bf16.gmra.mrb[0].mxu0 %v370
    %v435 = vpop.f32.mrb[0].mxu0
    %v436 = vadd.f32 0.0, %v435
    %v437 = vpop.f32.mrb[0].mxu0
    %v438 = vpop.f32.mrb[0].mxu0
    %v439 = vadd.f32 0.0, %v438
    %v440 = vpop.f32.mrb[0].mxu0
    %441 = vmatprep.mubr.bf16.mxu0 0
    %442 = vmatmul.mubr.bf16.gmra.mrb[0].mxu0 %v371
    %v443 = vpop.f32.mrb[0].mxu0
    %v444 = vadd.f32 0.0, %v443
    %v445 = vpop.f32.mrb[0].mxu0
    %v446 = vpop.f32.mrb[0].mxu0
    %v447 = vadd.f32 0.0, %v446
    %v448 = vpop.f32.mrb[0].mxu0
    %449 = vmatprep.mubr.bf16.mxu0 0
    %450 = vmatmul.mubr.bf16.gmra.mrb[0].mxu0 %v372
    %v451 = vpop.f32.mrb[0].mxu0
    %v452 = vadd.f32 0.0, %v451
    %v453 = vpop.f32.mrb[0].mxu0
    %v454 = vpop.f32.mrb[0].mxu0
    %v455 = vadd.f32 0.0, %v454
    %v456 = vpop.f32.mrb[0].mxu0
    %457 = vmatprep.mubr.bf16.mxu0 0
    %458 = vmatmul.mubr.bf16.gmra.mrb[0].mxu0 %v373
    %v459 = vpop.f32.mrb[0].mxu0
    %v460 = vadd.f32 0.0, %v459
    %v461 = vpop.f32.mrb[0].mxu0
    %v462 = vpop.f32.mrb[0].mxu0
    %v463 = vadd.f32 0.0, %v462
    %v464 = vpop.f32.mrb[0].mxu0
    %465 = vmatprep.mubr.bf16.mxu0 0
    %466 = vmatmul.mubr.bf16.gmra.mrb[0].mxu0 %v374
    %v467 = vpop.f32.mrb[0].mxu0
    %v468 = vadd.f32 0.0, %v467
    %v469 = vpop.f32.mrb[0].mxu0
    %v470 = vpop.f32.mrb[0].mxu0
    %v471 = vadd.f32 0.0, %v470
    %v472 = vpop.f32.mrb[0].mxu0
    %473 = vmatprep.mubr.bf16.mxu0 0
    %474 = vmatmul.mubr.bf16.gmra.mrb[0].mxu0 %v375
    %v475 = vpop.f32.mrb[0].mxu0
    %v476 = vadd.f32 0.0, %v475
    %v477 = vpop.f32.mrb[0].mxu0
    %v478 = vpop.f32.mrb[0].mxu0
    %v479 = vadd.f32 0.0, %v478
    %v480 = vpop.f32.mrb[0].mxu0
    %481 = vmatprep.mubr.bf16.mxu0 0
    %482 = vmatmul.mubr.bf16.gmra.mrb[0].mxu0 %v376
    %v483 = vpop.f32.mrb[0].mxu0
    %v484 = vadd.f32 0.0, %v483
    %v485 = vpop.f32.mrb[0].mxu0
    %v486 = vpop.f32.mrb[0].mxu0
    %v487 = vadd.f32 0.0, %v486
    %v488 = vpop.f32.mrb[0].mxu0
    %489 = vmatprep.mubr.bf16.mxu0 0
    %490 = vmatmul.mubr.bf16.gmra.mrb[0].mxu0 %v385
    %v491 = vpop.f32.mrb[0].mxu0
    %v492 = vadd.f32 0.0, %v491
    %v493 = vpop.f32.mrb[0].mxu0
    %v494 = vpop.f32.mrb[0].mxu0
    %v495 = vadd.f32 0.0, %v494
    %v496 = vpop.f32.mrb[0].mxu0
    %497 = vmatprep.mubr.bf16.mxu0 0
    %498 = vmatmul.mubr.bf16.gmra.mrb[0].mxu0 %v386
    %v499 = vpop.f32.mrb[0].mxu0
    %v500 = vadd.f32 0.0, %v499
    %v501 = vpop.f32.mrb[0].mxu0
    %v502 = vpop.f32.mrb[0].mxu0
    %v503 = vadd.f32 0.0, %v502
    %v504 = vpop.f32.mrb[0].mxu0
    %505 = vmatprep.mubr.bf16.mxu0 0
    %506 = vmatmul.mubr.bf16.gmra.mrb[0].mxu0 %v387
    %v507 = vpop.f32.mrb[0].mxu0
    %v508 = vadd.f32 0.0, %v507
    %v509 = vpop.f32.mrb[0].mxu0
    %v510 = vpop.f32.mrb[0].mxu0
    %v511 = vadd.f32 0.0, %v510
    %v512 = vpop.f32.mrb[0].mxu0
    %513 = vmatprep.mubr.bf16.mxu0 0
    %514 = vmatmul.mubr.bf16.gmra.mrb[0].mxu0 %v388
    %v515 = vpop.f32.mrb[0].mxu0
    %v516 = vadd.f32 0.0, %v515
    %v517 = vpop.f32.mrb[0].mxu0
    %v518 = vpop.f32.mrb[0].mxu0
    %v519 = vadd.f32 0.0, %v518
    %v520 = vpop.f32.mrb[0].mxu0
    %521 = vmatprep.mubr.bf16.mxu0 0
    %522 = vmatmul.mubr.bf16.gmra.mrb[0].mxu0 %v389
    %v523 = vpop.f32.mrb[0].mxu0
    %v524 = vadd.f32 0.0, %v523
    %v525 = vpop.f32.mrb[0].mxu0
    %v526 = vpop.f32.mrb[0].mxu0
    %v527 = vadd.f32 0.0, %v526
    %v528 = vpop.f32.mrb[0].mxu0
    %529 = vmatprep.mubr.bf16.mxu0 0
    %530 = vmatmul.mubr.bf16.gmra.mrb[0].mxu0 %v390
    %v531 = vpop.f32.mrb[0].mxu0
    %v532 = vadd.f32 0.0, %v531
    %v533 = vpop.f32.mrb[0].mxu0
    %v534 = vpop.f32.mrb[0].mxu0
    %v535 = vadd.f32 0.0, %v534
    %v536 = vpop.f32.mrb[0].mxu0
    %537 = vmatprep.mubr.bf16.mxu0 0
    %538 = vmatmul.mubr.bf16.gmra.mrb[0].mxu0 %v391
    %v539 = vpop.f32.mrb[0].mxu0
    %v540 = vadd.f32 0.0, %v539
    %v541 = vpop.f32.mrb[0].mxu0
    %v542 = vpop.f32.mrb[0].mxu0
    %v543 = vadd.f32 0.0, %v542
    %v544 = vpop.f32.mrb[0].mxu0
    %545 = vmatprep.mubr.bf16.mxu0 0
    %546 = vmatmul.mubr.bf16.gmra.mrb[0].mxu0 %v392
    %v547 = vpop.f32.mrb[0].mxu0
    %v548 = vadd.f32 0.0, %v547
    %v549 = vpop.f32.mrb[0].mxu0
    %v550 = vpop.f32.mrb[0].mxu0
    %v551 = vadd.f32 0.0, %v550
    %v552 = vpop.f32.mrb[0].mxu0
    %553 = vdwg.mxu0
    %554 = vmatprep.subr.mxu0 0.0
    %555 = vmatpush1.msra.mxu0 %v299
    %556 = vmatprep.subr.mxu0 0.0
    %557 = vmatpush1.msra.mxu0 %v302
    %558 = vmatprep.subr.mxu0 0.0
    %559 = vmatpush1.msra.mxu0 %v307
    %560 = vmatprep.subr.mxu0 0.0
    %561 = vmatpush1.msra.mxu0 %v310
    %562 = vmatprep.subr.mxu0 0.0
    %563 = vmatpush1.msra.mxu0 %v315
    %564 = vmatprep.subr.mxu0 0.0
    %565 = vmatpush1.msra.mxu0 %v318
    %566 = vmatprep.subr.mxu0 0.0
    %567 = vmatpush1.msra.mxu0 %v323
    %568 = vmatprep.subr.mxu0 0.0
    %569 = vmatpush1.msra.mxu0 %v326
    %570 = vmatprep.subr.mxu0 0.0
    %571 = vmatpush1.msra.mxu0 %v331
    %572 = vmatprep.subr.mxu0 0.0
    %573 = vmatpush1.msra.mxu0 %v334
    %574 = vmatprep.subr.mxu0 0.0
    %575 = vmatpush1.msra.mxu0 %v339
    %576 = vmatprep.subr.mxu0 0.0
    %577 = vmatpush1.msra.mxu0 %v342
    %578 = vmatprep.subr.mxu0 0.0
    %579 = vmatpush1.msra.mxu0 %v347
    %580 = vmatprep.subr.mxu0 0.0
    %581 = vmatpush1.msra.mxu0 %v350
    %582 = vmatprep.subr.mxu0 0.0
    %583 = vmatpush1.msra.mxu0 %v355
    %584 = vmatprep.subr.mxu0 0.0
    %585 = vmatpush1.msra.mxu0 %v358
    %586 = vmatprep.subr.mxu0 0.0
    %587 = vmatpush1.msra.mxu0 0.0
    %588 = vmatprep.subr.mxu0 0.0
    %589 = vmatpush1.msra.mxu0 0.0
    %590 = vmatprep.subr.mxu0 0.0
    %591 = vmatpush1.msra.mxu0 0.0
    %592 = vmatprep.subr.mxu0 0.0
    %593 = vmatpush1.msra.mxu0 0.0
    %594 = vmatprep.subr.mxu0 0.0
    %595 = vmatpush1.msra.mxu0 0.0
    %596 = vmatprep.subr.mxu0 0.0
    %597 = vmatpush1.msra.mxu0 0.0
    %598 = vmatprep.subr.mxu0 0.0
    %599 = vmatpush1.msra.mxu0 0.0
    %600 = vmatprep.subr.mxu0 0.0
    %601 = vmatpush1.msra.mxu0 0.0
    %602 = vmatprep.subr.mxu0 0.0
    %603 = vmatpush1.msra.mxu0 0.0
    %604 = vmatprep.subr.mxu0 0.0
    %605 = vmatpush1.msra.mxu0 0.0
    %606 = vmatprep.subr.mxu0 0.0
    %607 = vmatpush1.msra.mxu0 0.0
    %608 = vmatprep.subr.mxu0 0.0
    %609 = vmatpush1.msra.mxu0 0.0
    %610 = vmatprep.subr.mxu0 0.0
    %611 = vmatpush1.msra.mxu0 0.0
    %612 = vmatprep.subr.mxu0 0.0
    %613 = vmatpush1.msra.mxu0 0.0
    %614 = vmatprep.subr.mxu0 0.0
    %615 = vmatpush1.msra.mxu0 0.0
    %616 = vmatprep.subr.mxu0 0.0
    %617 = vmatpush1.msra.mxu0 0.0
    %618 = vmatprep.mubr.f32.mxu0 0.0
    %619 = vmatmul.mubr.f32.gmra.mrb[0].mxu0 %v75
    %v620 = vpop.f32.mrb[0].mxu0
    %v621 = vadd.f32 0.0, %v620
    %v622 = vpop.f32.mrb[0].mxu0
    %623 = vdwg.mxu0
    %624 = vmatprep.subr.mxu0 0.0
    %625 = vmatpush1.msra.mxu0 %v96
    %626 = vmatprep.subr.mxu0 0.0
    %627 = vmatpush1.msra.mxu0 %v97
    %628 = vmatprep.subr.mxu0 0.0
    %629 = vmatpush1.msra.mxu0 %v98
    %630 = vmatprep.subr.mxu0 0.0
    %631 = vmatpush1.msra.mxu0 %v99
    %632 = vmatprep.subr.mxu0 0.0
    %633 = vmatpush1.msra.mxu0 %v100
    %634 = vmatprep.subr.mxu0 0.0
    %635 = vmatpush1.msra.mxu0 %v101
    %636 = vmatprep.subr.mxu0 0.0
    %637 = vmatpush1.msra.mxu0 %v102
    %638 = vmatprep.subr.mxu0 0.0
    %639 = vmatpush1.msra.mxu0 %v103
    %640 = vmatprep.subr.mxu0 0.0
    %641 = vmatpush1.msra.mxu0 %v104
    %642 = vmatprep.subr.mxu0 0.0
    %643 = vmatpush1.msra.mxu0 %v105
    %644 = vmatprep.subr.mxu0 0.0
    %645 = vmatpush1.msra.mxu0 %v106
    %646 = vmatprep.subr.mxu0 0.0
    %647 = vmatpush1.msra.mxu0 %v107
    %648 = vmatprep.subr.mxu0 0.0
    %649 = vmatpush1.msra.mxu0 %v108
    %650 = vmatprep.subr.mxu0 0.0
    %651 = vmatpush1.msra.mxu0 %v109
    %652 = vmatprep.subr.mxu0 0.0
    %653 = vmatpush1.msra.mxu0 %v110
    %654 = vmatprep.subr.mxu0 0.0
    %655 = vmatpush1.msra.mxu0 %v111
    %656 = vmatprep.subr.mxu0 0.0
    %657 = vmatpush1.msra.mxu0 0.0
    %658 = vmatprep.subr.mxu0 0.0
    %659 = vmatpush1.msra.mxu0 0.0
    %660 = vmatprep.subr.mxu0 0.0
    %661 = vmatpush1.msra.mxu0 0.0
    %662 = vmatprep.subr.mxu0 0.0
    %663 = vmatpush1.msra.mxu0 0.0
    %664 = vmatprep.subr.mxu0 0.0
    %665 = vmatpush1.msra.mxu0 0.0
    %666 = vmatprep.subr.mxu0 0.0
    %667 = vmatpush1.msra.mxu0 0.0
    %668 = vmatprep.subr.mxu0 0.0
    %669 = vmatpush1.msra.mxu0 0.0
    %670 = vmatprep.subr.mxu0 0.0
    %671 = vmatpush1.msra.mxu0 0.0
    %672 = vmatprep.subr.mxu0 0.0
    %673 = vmatpush1.msra.mxu0 0.0
    %674 = vmatprep.subr.mxu0 0.0
    %675 = vmatpush1.msra.mxu0 0.0
    %676 = vmatprep.subr.mxu0 0.0
    %677 = vmatpush1.msra.mxu0 0.0
    %678 = vmatprep.subr.mxu0 0.0
    %679 = vmatpush1.msra.mxu0 0.0
    %680 = vmatprep.subr.mxu0 0.0
    %681 = vmatpush1.msra.mxu0 0.0
    %682 = vmatprep.subr.mxu0 0.0
    %683 = vmatpush1.msra.mxu0 0.0
    %684 = vmatprep.subr.mxu0 0.0
    %685 = vmatpush1.msra.mxu0 0.0
    %686 = vmatprep.subr.mxu0 0.0
    %687 = vmatpush1.msra.mxu0 0.0
    %688 = vmatprep.mubr.f32.mxu0 0.0
    %689 = vmatmul.mubr.f32.gmra.mrb[0].mxu0 %v75
    %v690 = vpop.f32.mrb[0].mxu0
    %v691 = vadd.f32 %v621, %v690
    %v692 = vpop.f32.mrb[0].mxu0
    %693 = vdwg.mxu0
    %694 = vmatprep.subr.mxu0 0.0
    %695 = vmatpush1.msra.mxu0 %v428
    %696 = vmatprep.subr.mxu0 0.0
    %697 = vmatpush1.msra.mxu0 %v431
    %698 = vmatprep.subr.mxu0 0.0
    %699 = vmatpush1.msra.mxu0 %v436
    %700 = vmatprep.subr.mxu0 0.0
    %701 = vmatpush1.msra.mxu0 %v439
    %702 = vmatprep.subr.mxu0 0.0
    %703 = vmatpush1.msra.mxu0 %v444
    %704 = vmatprep.subr.mxu0 0.0
    %705 = vmatpush1.msra.mxu0 %v447
    %706 = vmatprep.subr.mxu0 0.0
    %707 = vmatpush1.msra.mxu0 %v452
    %708 = vmatprep.subr.mxu0 0.0
    %709 = vmatpush1.msra.mxu0 %v455
    %710 = vmatprep.subr.mxu0 0.0
    %711 = vmatpush1.msra.mxu0 %v460
    %712 = vmatprep.subr.mxu0 0.0
    %713 = vmatpush1.msra.mxu0 %v463
    %714 = vmatprep.subr.mxu0 0.0
    %715 = vmatpush1.msra.mxu0 %v468
    %716 = vmatprep.subr.mxu0 0.0
    %717 = vmatpush1.msra.mxu0 %v471
    %718 = vmatprep.subr.mxu0 0.0
    %719 = vmatpush1.msra.mxu0 %v476
    %720 = vmatprep.subr.mxu0 0.0
    %721 = vmatpush1.msra.mxu0 %v479
    %722 = vmatprep.subr.mxu0 0.0
    %723 = vmatpush1.msra.mxu0 %v484
    %724 = vmatprep.subr.mxu0 0.0
    %725 = vmatpush1.msra.mxu0 %v487
    %726 = vmatprep.subr.mxu0 0.0
    %727 = vmatpush1.msra.mxu0 %v492
    %728 = vmatprep.subr.mxu0 0.0
    %729 = vmatpush1.msra.mxu0 %v495
    %730 = vmatprep.subr.mxu0 0.0
    %731 = vmatpush1.msra.mxu0 %v500
    %732 = vmatprep.subr.mxu0 0.0
    %733 = vmatpush1.msra.mxu0 %v503
    %734 = vmatprep.subr.mxu0 0.0
    %735 = vmatpush1.msra.mxu0 %v508
    %736 = vmatprep.subr.mxu0 0.0
    %737 = vmatpush1.msra.mxu0 %v511
    %738 = vmatprep.subr.mxu0 0.0
    %739 = vmatpush1.msra.mxu0 %v516
    %740 = vmatprep.subr.mxu0 0.0
    %741 = vmatpush1.msra.mxu0 %v519
    %742 = vmatprep.subr.mxu0 0.0
    %743 = vmatpush1.msra.mxu0 %v524
    %744 = vmatprep.subr.mxu0 0.0
    %745 = vmatpush1.msra.mxu0 %v527
    %746 = vmatprep.subr.mxu0 0.0
    %747 = vmatpush1.msra.mxu0 %v532
    %748 = vmatprep.subr.mxu0 0.0
    %749 = vmatpush1.msra.mxu0 %v535
    %750 = vmatprep.subr.mxu0 0.0
    %751 = vmatpush1.msra.mxu0 %v540
    %752 = vmatprep.subr.mxu0 0.0
    %753 = vmatpush1.msra.mxu0 %v543
    %754 = vmatprep.subr.mxu0 0.0
    %755 = vmatpush1.msra.mxu0 %v548
    %756 = vmatprep.subr.mxu0 0.0
    %757 = vmatpush1.msra.mxu0 %v551
    %758 = vmatprep.mubr.f32.mxu0 %v85
    %759 = vmatmul.mubr.f32.gmra.mrb[0].mxu0 %v84
    %v760 = vpop.f32.mrb[0].mxu0
    %v761 = vadd.f32 0.0, %v760
    %v762 = vpop.f32.mrb[0].mxu0
    %763 = vdwg.mxu0
    %764 = vmatprep.subr.mxu0 0.0
    %765 = vmatpush1.msra.mxu0 %v112
    %766 = vmatprep.subr.mxu0 0.0
    %767 = vmatpush1.msra.mxu0 %v113
    %768 = vmatprep.subr.mxu0 0.0
    %769 = vmatpush1.msra.mxu0 %v114
    %770 = vmatprep.subr.mxu0 0.0
    %771 = vmatpush1.msra.mxu0 %v115
    %772 = vmatprep.subr.mxu0 0.0
    %773 = vmatpush1.msra.mxu0 %v116
    %774 = vmatprep.subr.mxu0 0.0
    %775 = vmatpush1.msra.mxu0 %v117
    %776 = vmatprep.subr.mxu0 0.0
    %777 = vmatpush1.msra.mxu0 %v118
    %778 = vmatprep.subr.mxu0 0.0
    %779 = vmatpush1.msra.mxu0 %v119
    %780 = vmatprep.subr.mxu0 0.0
    %781 = vmatpush1.msra.mxu0 %v120
    %782 = vmatprep.subr.mxu0 0.0
    %783 = vmatpush1.msra.mxu0 %v121
    %784 = vmatprep.subr.mxu0 0.0
    %785 = vmatpush1.msra.mxu0 %v122
    %786 = vmatprep.subr.mxu0 0.0
    %787 = vmatpush1.msra.mxu0 %v123
    %788 = vmatprep.subr.mxu0 0.0
    %789 = vmatpush1.msra.mxu0 %v124
    %790 = vmatprep.subr.mxu0 0.0
    %791 = vmatpush1.msra.mxu0 %v125
    %792 = vmatprep.subr.mxu0 0.0
    %793 = vmatpush1.msra.mxu0 %v126
    %794 = vmatprep.subr.mxu0 0.0
    %795 = vmatpush1.msra.mxu0 %v127
    %796 = vmatprep.subr.mxu0 0.0
    %797 = vmatpush1.msra.mxu0 %v128
    %798 = vmatprep.subr.mxu0 0.0
    %799 = vmatpush1.msra.mxu0 %v129
    %800 = vmatprep.subr.mxu0 0.0
    %801 = vmatpush1.msra.mxu0 %v130
    %802 = vmatprep.subr.mxu0 0.0
    %803 = vmatpush1.msra.mxu0 %v131
    %804 = vmatprep.subr.mxu0 0.0
    %805 = vmatpush1.msra.mxu0 %v132
    %806 = vmatprep.subr.mxu0 0.0
    %807 = vmatpush1.msra.mxu0 %v133
    %808 = vmatprep.subr.mxu0 0.0
    %809 = vmatpush1.msra.mxu0 %v134
    %810 = vmatprep.subr.mxu0 0.0
    %811 = vmatpush1.msra.mxu0 %v135
    %812 = vmatprep.subr.mxu0 0.0
    %813 = vmatpush1.msra.mxu0 %v136
    %814 = vmatprep.subr.mxu0 0.0
    %815 = vmatpush1.msra.mxu0 %v137
    %816 = vmatprep.subr.mxu0 0.0
    %817 = vmatpush1.msra.mxu0 %v138
    %818 = vmatprep.subr.mxu0 0.0
    %819 = vmatpush1.msra.mxu0 %v139
    %820 = vmatprep.subr.mxu0 0.0
    %821 = vmatpush1.msra.mxu0 %v140
    %822 = vmatprep.subr.mxu0 0.0
    %823 = vmatpush1.msra.mxu0 %v141
    %824 = vmatprep.subr.mxu0 0.0
    %825 = vmatpush1.msra.mxu0 %v142
    %826 = vmatprep.subr.mxu0 0.0
    %827 = vmatpush1.msra.mxu0 %v143
    %828 = vmatprep.mubr.f32.mxu0 %v85
    %829 = vmatmul.mubr.f32.gmra.mrb[0].mxu0 %v84
    %v830 = vpop.f32.mrb[0].mxu0
    %v831 = vadd.f32 %v761, %v830
    %v832 = vpop.f32.mrb[0].mxu0
    %833 = vdwg.mxu0
    %834 = vmatprep.subr.mxu0 0.0
    %835 = vmatpush1.msra.mxu0 %v428
    %836 = vmatprep.subr.mxu0 0.0
    %837 = vmatpush1.msra.mxu0 %v431
    %838 = vmatprep.subr.mxu0 0.0
    %839 = vmatpush1.msra.mxu0 %v436
    %840 = vmatprep.subr.mxu0 0.0
    %841 = vmatpush1.msra.mxu0 %v439
    %842 = vmatprep.subr.mxu0 0.0
    %843 = vmatpush1.msra.mxu0 %v444
    %844 = vmatprep.subr.mxu0 0.0
    %845 = vmatpush1.msra.mxu0 %v447
    %846 = vmatprep.subr.mxu0 0.0
    %847 = vmatpush1.msra.mxu0 %v452
    %848 = vmatprep.subr.mxu0 0.0
    %849 = vmatpush1.msra.mxu0 %v455
    %850 = vmatprep.subr.mxu0 0.0
    %851 = vmatpush1.msra.mxu0 %v460
    %852 = vmatprep.subr.mxu0 0.0
    %853 = vmatpush1.msra.mxu0 %v463
    %854 = vmatprep.subr.mxu0 0.0
    %855 = vmatpush1.msra.mxu0 %v468
    %856 = vmatprep.subr.mxu0 0.0
    %857 = vmatpush1.msra.mxu0 %v471
    %858 = vmatprep.subr.mxu0 0.0
    %859 = vmatpush1.msra.mxu0 %v476
    %860 = vmatprep.subr.mxu0 0.0
    %861 = vmatpush1.msra.mxu0 %v479
    %862 = vmatprep.subr.mxu0 0.0
    %863 = vmatpush1.msra.mxu0 %v484
    %864 = vmatprep.subr.mxu0 0.0
    %865 = vmatpush1.msra.mxu0 %v487
    %866 = vmatprep.subr.mxu0 0.0
    %867 = vmatpush1.msra.mxu0 %v492
    %868 = vmatprep.subr.mxu0 0.0
    %869 = vmatpush1.msra.mxu0 %v495
    %870 = vmatprep.subr.mxu0 0.0
    %871 = vmatpush1.msra.mxu0 %v500
    %872 = vmatprep.subr.mxu0 0.0
    %873 = vmatpush1.msra.mxu0 %v503
    %874 = vmatprep.subr.mxu0 0.0
    %875 = vmatpush1.msra.mxu0 %v508
    %876 = vmatprep.subr.mxu0 0.0
    %877 = vmatpush1.msra.mxu0 %v511
    %878 = vmatprep.subr.mxu0 0.0
    %879 = vmatpush1.msra.mxu0 %v516
    %880 = vmatprep.subr.mxu0 0.0
    %881 = vmatpush1.msra.mxu0 %v519
    %882 = vmatprep.subr.mxu0 0.0
    %883 = vmatpush1.msra.mxu0 %v524
    %884 = vmatprep.subr.mxu0 0.0
    %885 = vmatpush1.msra.mxu0 %v527
    %886 = vmatprep.subr.mxu0 0.0
    %887 = vmatpush1.msra.mxu0 %v532
    %888 = vmatprep.subr.mxu0 0.0
    %889 = vmatpush1.msra.mxu0 %v535
    %890 = vmatprep.subr.mxu0 0.0
    %891 = vmatpush1.msra.mxu0 %v540
    %892 = vmatprep.subr.mxu0 0.0
    %893 = vmatpush1.msra.mxu0 %v543
    %894 = vmatprep.subr.mxu0 0.0
    %895 = vmatpush1.msra.mxu0 %v548
    %896 = vmatprep.subr.mxu0 0.0
    %897 = vmatpush1.msra.mxu0 %v551
    %898 = vmatprep.mubr.f32.mxu0 %v95
    %899 = vmatmul.mubr.f32.gmra.mrb[0].mxu0 %v94
    %v900 = vpop.f32.mrb[0].mxu0
    %v901 = vadd.f32 0.0, %v900
    %v902 = vpop.f32.mrb[0].mxu0
    %903 = vdwg.mxu0
    %904 = vmatprep.subr.mxu0 0.0
    %905 = vmatpush1.msra.mxu0 %v112
    %906 = vmatprep.subr.mxu0 0.0
    %907 = vmatpush1.msra.mxu0 %v113
    %908 = vmatprep.subr.mxu0 0.0
    %909 = vmatpush1.msra.mxu0 %v114
    %910 = vmatprep.subr.mxu0 0.0
    %911 = vmatpush1.msra.mxu0 %v115
    %912 = vmatprep.subr.mxu0 0.0
    %913 = vmatpush1.msra.mxu0 %v116
    %914 = vmatprep.subr.mxu0 0.0
    %915 = vmatpush1.msra.mxu0 %v117
    %916 = vmatprep.subr.mxu0 0.0
    %917 = vmatpush1.msra.mxu0 %v118
    %918 = vmatprep.subr.mxu0 0.0
    %919 = vmatpush1.msra.mxu0 %v119
    %920 = vmatprep.subr.mxu0 0.0
    %921 = vmatpush1.msra.mxu0 %v120
    %922 = vmatprep.subr.mxu0 0.0
    %923 = vmatpush1.msra.mxu0 %v121
    %924 = vmatprep.subr.mxu0 0.0
    %925 = vmatpush1.msra.mxu0 %v122
    %926 = vmatprep.subr.mxu0 0.0
    %927 = vmatpush1.msra.mxu0 %v123
    %928 = vmatprep.subr.mxu0 0.0
    %929 = vmatpush1.msra.mxu0 %v124
    %930 = vmatprep.subr.mxu0 0.0
    %931 = vmatpush1.msra.mxu0 %v125
    %932 = vmatprep.subr.mxu0 0.0
    %933 = vmatpush1.msra.mxu0 %v126
    %934 = vmatprep.subr.mxu0 0.0
    %935 = vmatpush1.msra.mxu0 %v127
    %936 = vmatprep.subr.mxu0 0.0
    %937 = vmatpush1.msra.mxu0 %v128
    %938 = vmatprep.subr.mxu0 0.0
    %939 = vmatpush1.msra.mxu0 %v129
    %940 = vmatprep.subr.mxu0 0.0
    %941 = vmatpush1.msra.mxu0 %v130
    %942 = vmatprep.subr.mxu0 0.0
    %943 = vmatpush1.msra.mxu0 %v131
    %944 = vmatprep.subr.mxu0 0.0
    %945 = vmatpush1.msra.mxu0 %v132
    %946 = vmatprep.subr.mxu0 0.0
    %947 = vmatpush1.msra.mxu0 %v133
    %948 = vmatprep.subr.mxu0 0.0
    %949 = vmatpush1.msra.mxu0 %v134
    %950 = vmatprep.subr.mxu0 0.0
    %951 = vmatpush1.msra.mxu0 %v135
    %952 = vmatprep.subr.mxu0 0.0
    %953 = vmatpush1.msra.mxu0 %v136
    %954 = vmatprep.subr.mxu0 0.0
    %955 = vmatpush1.msra.mxu0 %v137
    %956 = vmatprep.subr.mxu0 0.0
    %957 = vmatpush1.msra.mxu0 %v138
    %958 = vmatprep.subr.mxu0 0.0
    %959 = vmatpush1.msra.mxu0 %v139
    %960 = vmatprep.subr.mxu0 0.0
    %961 = vmatpush1.msra.mxu0 %v140
    %962 = vmatprep.subr.mxu0 0.0
    %963 = vmatpush1.msra.mxu0 %v141
    %964 = vmatprep.subr.mxu0 0.0
    %965 = vmatpush1.msra.mxu0 %v142
    %966 = vmatprep.subr.mxu0 0.0
    %967 = vmatpush1.msra.mxu0 %v143
    %968 = vmatprep.mubr.f32.mxu0 %v95
    %969 = vmatmul.mubr.f32.gmra.mrb[0].mxu0 %v94
    %v970 = vpop.f32.mrb[0].mxu0
    %v971 = vadd.f32 %v901, %v970
    %v972 = vpop.f32.mrb[0].mxu0
    %973 = vdwg.mxu0
    %v974 = vpack.c.bf16 %v302, %v299
    %v975 = vpack.c.bf16 %v310, %v307
    %v976 = vpack.c.bf16 %v318, %v315
    %v977 = vpack.c.bf16 %v326, %v323
    %v978 = vpack.c.bf16 %v334, %v331
    %v979 = vpack.c.bf16 %v342, %v339
    %v980 = vpack.c.bf16 %v350, %v347
    %v981 = vpack.c.bf16 %v358, %v355
    %v982 = vpack.c.bf16 %v431, %v428
    %v983 = vpack.c.bf16 %v439, %v436
    %v984 = vpack.c.bf16 %v447, %v444
    %v985 = vpack.c.bf16 %v455, %v452
    %v986 = vpack.c.bf16 %v463, %v460
    %v987 = vpack.c.bf16 %v471, %v468
    %v988 = vpack.c.bf16 %v479, %v476
    %v989 = vpack.c.bf16 %v487, %v484
    %v990 = vpack.c.bf16 %v495, %v492
    %v991 = vpack.c.bf16 %v503, %v500
    %v992 = vpack.c.bf16 %v511, %v508
    %v993 = vpack.c.bf16 %v519, %v516
    %v994 = vpack.c.bf16 %v527, %v524
    %v995 = vpack.c.bf16 %v535, %v532
    %v996 = vpack.c.bf16 %v543, %v540
    %v997 = vpack.c.bf16 %v551, %v548
    %998 = vmatprep.subr.bf16.mxu0 0
    %999 = vmatpush1.bf16.msra.mxu0 %v982
    %1000 = vmatprep.subr.bf16.mxu0 0
    %1001 = vmatpush1.bf16.msra.mxu0 %v983
    %1002 = vmatprep.subr.bf16.mxu0 0
    %1003 = vmatpush1.bf16.msra.mxu0 %v984
    %1004 = vmatprep.subr.bf16.mxu0 0
    %1005 = vmatpush1.bf16.msra.mxu0 %v985
    %1006 = vmatprep.subr.bf16.mxu0 0
    %1007 = vmatpush1.bf16.msra.mxu0 %v986
    %1008 = vmatprep.subr.bf16.mxu0 0
    %1009 = vmatpush1.bf16.msra.mxu0 %v987
    %1010 = vmatprep.subr.bf16.mxu0 0
    %1011 = vmatpush1.bf16.msra.mxu0 %v988
    %1012 = vmatprep.subr.bf16.mxu0 0
    %1013 = vmatpush1.bf16.msra.mxu0 %v989
    %1014 = vmatprep.subr.bf16.mxu0 0
    %1015 = vmatpush1.bf16.msra.mxu0 %v990
    %1016 = vmatprep.subr.bf16.mxu0 0
    %1017 = vmatpush1.bf16.msra.mxu0 %v991
    %1018 = vmatprep.subr.bf16.mxu0 0
    %1019 = vmatpush1.bf16.msra.mxu0 %v992
    %1020 = vmatprep.subr.bf16.mxu0 0
    %1021 = vmatpush1.bf16.msra.mxu0 %v993
    %1022 = vmatprep.subr.bf16.mxu0 0
    %1023 = vmatpush1.bf16.msra.mxu0 %v994
    %1024 = vmatprep.subr.bf16.mxu0 0
    %1025 = vmatpush1.bf16.msra.mxu0 %v995
    %1026 = vmatprep.subr.bf16.mxu0 0
    %1027 = vmatpush1.bf16.msra.mxu0 %v996
    %1028 = vmatprep.subr.bf16.mxu0 0
    %1029 = vmatpush1.bf16.msra.mxu0 %v997
    %1030 = vmatprep.mubr.bf16.mxu0 %v233
    %1031 = vmatmul.mubr.bf16.gmra.mrb[0].mxu0 %v232
    %v1032 = vpop.f32.mrb[0].mxu0
    %v1033 = vadd.f32 0.0, %v1032
    %v1034 = vpop.f32.mrb[0].mxu0
    %v1035 = vpop.f32.mrb[0].mxu0
    %v1036 = vadd.f32 0.0, %v1035
    %v1037 = vpop.f32.mrb[0].mxu0
    %1038 = vmatprep.mubr.bf16.mxu0 %v235
    %1039 = vmatmul.mubr.bf16.gmra.mrb[0].mxu0 %v234
    %v1040 = vpop.f32.mrb[0].mxu0
    %v1041 = vadd.f32 0.0, %v1040
    %v1042 = vpop.f32.mrb[0].mxu0
    %v1043 = vpop.f32.mrb[0].mxu0
    %v1044 = vadd.f32 0.0, %v1043
    %v1045 = vpop.f32.mrb[0].mxu0
    %1046 = vmatprep.mubr.bf16.mxu0 %v237
    %1047 = vmatmul.mubr.bf16.gmra.mrb[0].mxu0 %v236
    %v1048 = vpop.f32.mrb[0].mxu0
    %v1049 = vadd.f32 0.0, %v1048
    %v1050 = vpop.f32.mrb[0].mxu0
    %v1051 = vpop.f32.mrb[0].mxu0
    %v1052 = vadd.f32 0.0, %v1051
    %v1053 = vpop.f32.mrb[0].mxu0
    %1054 = vmatprep.mubr.bf16.mxu0 %v239
    %1055 = vmatmul.mubr.bf16.gmra.mrb[0].mxu0 %v238
    %v1056 = vpop.f32.mrb[0].mxu0
    %v1057 = vadd.f32 0.0, %v1056
    %v1058 = vpop.f32.mrb[0].mxu0
    %v1059 = vpop.f32.mrb[0].mxu0
    %v1060 = vadd.f32 0.0, %v1059
    %v1061 = vpop.f32.mrb[0].mxu0
    %1062 = vmatprep.mubr.bf16.mxu0 %v241
    %1063 = vmatmul.mubr.bf16.gmra.mrb[0].mxu0 %v240
    %v1064 = vpop.f32.mrb[0].mxu0
    %v1065 = vadd.f32 0.0, %v1064
    %v1066 = vpop.f32.mrb[0].mxu0
    %v1067 = vpop.f32.mrb[0].mxu0
    %v1068 = vadd.f32 0.0, %v1067
    %v1069 = vpop.f32.mrb[0].mxu0
    %1070 = vmatprep.mubr.bf16.mxu0 %v243
    %1071 = vmatmul.mubr.bf16.gmra.mrb[0].mxu0 %v242
    %v1072 = vpop.f32.mrb[0].mxu0
    %v1073 = vadd.f32 0.0, %v1072
    %v1074 = vpop.f32.mrb[0].mxu0
    %v1075 = vpop.f32.mrb[0].mxu0
    %v1076 = vadd.f32 0.0, %v1075
    %v1077 = vpop.f32.mrb[0].mxu0
    %1078 = vmatprep.mubr.bf16.mxu0 %v245
    %1079 = vmatmul.mubr.bf16.gmra.mrb[0].mxu0 %v244
    %v1080 = vpop.f32.mrb[0].mxu0
    %v1081 = vadd.f32 0.0, %v1080
    %v1082 = vpop.f32.mrb[0].mxu0
    %v1083 = vpop.f32.mrb[0].mxu0
    %v1084 = vadd.f32 0.0, %v1083
    %v1085 = vpop.f32.mrb[0].mxu0
    %1086 = vmatprep.mubr.bf16.mxu0 %v247
    %1087 = vmatmul.mubr.bf16.gmra.mrb[0].mxu0 %v246
    %v1088 = vpop.f32.mrb[0].mxu0
    %v1089 = vadd.f32 0.0, %v1088
    %v1090 = vpop.f32.mrb[0].mxu0
    %v1091 = vpop.f32.mrb[0].mxu0
    %v1092 = vadd.f32 0.0, %v1091
    %v1093 = vpop.f32.mrb[0].mxu0
    %1094 = vdwg.mxu0
    %1095 = vmatprep.subr.bf16.mxu0 0
    %1096 = vmatpush1.bf16.msra.mxu0 %v974
    %1097 = vmatprep.subr.bf16.mxu0 0
    %1098 = vmatpush1.bf16.msra.mxu0 %v975
    %1099 = vmatprep.subr.bf16.mxu0 0
    %1100 = vmatpush1.bf16.msra.mxu0 %v976
    %1101 = vmatprep.subr.bf16.mxu0 0
    %1102 = vmatpush1.bf16.msra.mxu0 %v977
    %1103 = vmatprep.subr.bf16.mxu0 0
    %1104 = vmatpush1.bf16.msra.mxu0 %v978
    %1105 = vmatprep.subr.bf16.mxu0 0
    %1106 = vmatpush1.bf16.msra.mxu0 %v979
    %1107 = vmatprep.subr.bf16.mxu0 0
    %1108 = vmatpush1.bf16.msra.mxu0 %v980
    %1109 = vmatprep.subr.bf16.mxu0 0
    %1110 = vmatpush1.bf16.msra.mxu0 %v981
    %1111 = vmatprep.subr.bf16.mxu0 0
    %1112 = vmatpush1.bf16.msra.mxu0 0
    %1113 = vmatprep.subr.bf16.mxu0 0
    %1114 = vmatpush1.bf16.msra.mxu0 0
    %1115 = vmatprep.subr.bf16.mxu0 0
    %1116 = vmatpush1.bf16.msra.mxu0 0
    %1117 = vmatprep.subr.bf16.mxu0 0
    %1118 = vmatpush1.bf16.msra.mxu0 0
    %1119 = vmatprep.subr.bf16.mxu0 0
    %1120 = vmatpush1.bf16.msra.mxu0 0
    %1121 = vmatprep.subr.bf16.mxu0 0
    %1122 = vmatpush1.bf16.msra.mxu0 0
    %1123 = vmatprep.subr.bf16.mxu0 0
    %1124 = vmatpush1.bf16.msra.mxu0 0
    %1125 = vmatprep.subr.bf16.mxu0 0
    %1126 = vmatpush1.bf16.msra.mxu0 0
    %1127 = vmatprep.mubr.bf16.mxu0 0
    %1128 = vmatmul.mubr.bf16.gmra.mrb[0].mxu0 %v369
    %v1129 = vpop.f32.mrb[0].mxu0
    %v1130 = vadd.f32 0.0, %v1129
    %v1131 = vpop.f32.mrb[0].mxu0
    %v1132 = vpop.f32.mrb[0].mxu0
    %v1133 = vadd.f32 0.0, %v1132
    %v1134 = vpop.f32.mrb[0].mxu0
    %1135 = vmatprep.mubr.bf16.mxu0 0
    %1136 = vmatmul.mubr.bf16.gmra.mrb[0].mxu0 %v370
    %v1137 = vpop.f32.mrb[0].mxu0
    %v1138 = vadd.f32 0.0, %v1137
    %v1139 = vpop.f32.mrb[0].mxu0
    %v1140 = vpop.f32.mrb[0].mxu0
    %v1141 = vadd.f32 0.0, %v1140
    %v1142 = vpop.f32.mrb[0].mxu0
    %1143 = vmatprep.mubr.bf16.mxu0 0
    %1144 = vmatmul.mubr.bf16.gmra.mrb[0].mxu0 %v371
    %v1145 = vpop.f32.mrb[0].mxu0
    %v1146 = vadd.f32 0.0, %v1145
    %v1147 = vpop.f32.mrb[0].mxu0
    %v1148 = vpop.f32.mrb[0].mxu0
    %v1149 = vadd.f32 0.0, %v1148
    %v1150 = vpop.f32.mrb[0].mxu0
    %1151 = vmatprep.mubr.bf16.mxu0 0
    %1152 = vmatmul.mubr.bf16.gmra.mrb[0].mxu0 %v372
    %v1153 = vpop.f32.mrb[0].mxu0
    %v1154 = vadd.f32 0.0, %v1153
    %v1155 = vpop.f32.mrb[0].mxu0
    %v1156 = vpop.f32.mrb[0].mxu0
    %v1157 = vadd.f32 0.0, %v1156
    %v1158 = vpop.f32.mrb[0].mxu0
    %1159 = vmatprep.mubr.bf16.mxu0 0
    %1160 = vmatmul.mubr.bf16.gmra.mrb[0].mxu0 %v373
    %v1161 = vpop.f32.mrb[0].mxu0
    %v1162 = vadd.f32 0.0, %v1161
    %v1163 = vpop.f32.mrb[0].mxu0
    %v1164 = vpop.f32.mrb[0].mxu0
    %v1165 = vadd.f32 0.0, %v1164
    %v1166 = vpop.f32.mrb[0].mxu0
    %1167 = vmatprep.mubr.bf16.mxu0 0
    %1168 = vmatmul.mubr.bf16.gmra.mrb[0].mxu0 %v374
    %v1169 = vpop.f32.mrb[0].mxu0
    %v1170 = vadd.f32 0.0, %v1169
    %v1171 = vpop.f32.mrb[0].mxu0
    %v1172 = vpop.f32.mrb[0].mxu0
    %v1173 = vadd.f32 0.0, %v1172
    %v1174 = vpop.f32.mrb[0].mxu0
    %1175 = vmatprep.mubr.bf16.mxu0 0
    %1176 = vmatmul.mubr.bf16.gmra.mrb[0].mxu0 %v375
    %v1177 = vpop.f32.mrb[0].mxu0
    %v1178 = vadd.f32 0.0, %v1177
    %v1179 = vpop.f32.mrb[0].mxu0
    %v1180 = vpop.f32.mrb[0].mxu0
    %v1181 = vadd.f32 0.0, %v1180
    %v1182 = vpop.f32.mrb[0].mxu0
    %1183 = vmatprep.mubr.bf16.mxu0 0
    %1184 = vmatmul.mubr.bf16.gmra.mrb[0].mxu0 %v376
    %v1185 = vpop.f32.mrb[0].mxu0
    %v1186 = vadd.f32 0.0, %v1185
    %v1187 = vpop.f32.mrb[0].mxu0
    %v1188 = vpop.f32.mrb[0].mxu0
    %v1189 = vadd.f32 0.0, %v1188
    %v1190 = vpop.f32.mrb[0].mxu0
    %1191 = vmatprep.mubr.bf16.mxu0 0
    %1192 = vmatmul.mubr.bf16.gmra.mrb[0].mxu0 %v385
    %v1193 = vpop.f32.mrb[0].mxu0
    %v1194 = vadd.f32 0.0, %v1193
    %v1195 = vpop.f32.mrb[0].mxu0
    %v1196 = vpop.f32.mrb[0].mxu0
    %v1197 = vadd.f32 0.0, %v1196
    %v1198 = vpop.f32.mrb[0].mxu0
    %1199 = vmatprep.mubr.bf16.mxu0 0
    %1200 = vmatmul.mubr.bf16.gmra.mrb[0].mxu0 %v386
    %v1201 = vpop.f32.mrb[0].mxu0
    %v1202 = vadd.f32 0.0, %v1201
    %v1203 = vpop.f32.mrb[0].mxu0
    %v1204 = vpop.f32.mrb[0].mxu0
    %v1205 = vadd.f32 0.0, %v1204
    %v1206 = vpop.f32.mrb[0].mxu0
    %1207 = vmatprep.mubr.bf16.mxu0 0
    %1208 = vmatmul.mubr.bf16.gmra.mrb[0].mxu0 %v387
    %v1209 = vpop.f32.mrb[0].mxu0
    %v1210 = vadd.f32 0.0, %v1209
    %v1211 = vpop.f32.mrb[0].mxu0
    %v1212 = vpop.f32.mrb[0].mxu0
    %v1213 = vadd.f32 0.0, %v1212
    %v1214 = vpop.f32.mrb[0].mxu0
    %1215 = vmatprep.mubr.bf16.mxu0 0
    %1216 = vmatmul.mubr.bf16.gmra.mrb[0].mxu0 %v388
    %v1217 = vpop.f32.mrb[0].mxu0
    %v1218 = vadd.f32 0.0, %v1217
    %v1219 = vpop.f32.mrb[0].mxu0
    %v1220 = vpop.f32.mrb[0].mxu0
    %v1221 = vadd.f32 0.0, %v1220
    %v1222 = vpop.f32.mrb[0].mxu0
    %1223 = vmatprep.mubr.bf16.mxu0 0
    %1224 = vmatmul.mubr.bf16.gmra.mrb[0].mxu0 %v389
    %v1225 = vpop.f32.mrb[0].mxu0
    %v1226 = vadd.f32 0.0, %v1225
    %v1227 = vpop.f32.mrb[0].mxu0
    %v1228 = vpop.f32.mrb[0].mxu0
    %v1229 = vadd.f32 0.0, %v1228
    %v1230 = vpop.f32.mrb[0].mxu0
    %1231 = vmatprep.mubr.bf16.mxu0 0
    %1232 = vmatmul.mubr.bf16.gmra.mrb[0].mxu0 %v390
    %v1233 = vpop.f32.mrb[0].mxu0
    %v1234 = vadd.f32 0.0, %v1233
    %v1235 = vpop.f32.mrb[0].mxu0
    %v1236 = vpop.f32.mrb[0].mxu0
    %v1237 = vadd.f32 0.0, %v1236
    %v1238 = vpop.f32.mrb[0].mxu0
    %1239 = vmatprep.mubr.bf16.mxu0 0
    %1240 = vmatmul.mubr.bf16.gmra.mrb[0].mxu0 %v391
    %v1241 = vpop.f32.mrb[0].mxu0
    %v1242 = vadd.f32 0.0, %v1241
    %v1243 = vpop.f32.mrb[0].mxu0
    %v1244 = vpop.f32.mrb[0].mxu0
    %v1245 = vadd.f32 0.0, %v1244
    %v1246 = vpop.f32.mrb[0].mxu0
    %1247 = vmatprep.mubr.bf16.mxu0 0
    %1248 = vmatmul.mubr.bf16.gmra.mrb[0].mxu0 %v392
    %v1249 = vpop.f32.mrb[0].mxu0
    %v1250 = vadd.f32 0.0, %v1249
    %v1251 = vpop.f32.mrb[0].mxu0
    %v1252 = vpop.f32.mrb[0].mxu0
    %v1253 = vadd.f32 0.0, %v1252
    %v1254 = vpop.f32.mrb[0].mxu0
    %1255 = vdwg.mxu0
    %1256 = vmatprep.subr.mxu0 0.0
    %1257 = vmatpush1.msra.mxu0 %v1033
    %1258 = vmatprep.subr.mxu0 0.0
    %1259 = vmatpush1.msra.mxu0 %v1036
    %1260 = vmatprep.subr.mxu0 0.0
    %1261 = vmatpush1.msra.mxu0 %v1041
    %1262 = vmatprep.subr.mxu0 0.0
    %1263 = vmatpush1.msra.mxu0 %v1044
    %1264 = vmatprep.subr.mxu0 0.0
    %1265 = vmatpush1.msra.mxu0 %v1049
    %1266 = vmatprep.subr.mxu0 0.0
    %1267 = vmatpush1.msra.mxu0 %v1052
    %1268 = vmatprep.subr.mxu0 0.0
    %1269 = vmatpush1.msra.mxu0 %v1057
    %1270 = vmatprep.subr.mxu0 0.0
    %1271 = vmatpush1.msra.mxu0 %v1060
    %1272 = vmatprep.subr.mxu0 0.0
    %1273 = vmatpush1.msra.mxu0 %v1065
    %1274 = vmatprep.subr.mxu0 0.0
    %1275 = vmatpush1.msra.mxu0 %v1068
    %1276 = vmatprep.subr.mxu0 0.0
    %1277 = vmatpush1.msra.mxu0 %v1073
    %1278 = vmatprep.subr.mxu0 0.0
    %1279 = vmatpush1.msra.mxu0 %v1076
    %1280 = vmatprep.subr.mxu0 0.0
    %1281 = vmatpush1.msra.mxu0 %v1081
    %1282 = vmatprep.subr.mxu0 0.0
    %1283 = vmatpush1.msra.mxu0 %v1084
    %1284 = vmatprep.subr.mxu0 0.0
    %1285 = vmatpush1.msra.mxu0 %v1089
    %1286 = vmatprep.subr.mxu0 0.0
    %1287 = vmatpush1.msra.mxu0 %v1092
    %1288 = vmatprep.subr.mxu0 0.0
    %1289 = vmatpush1.msra.mxu0 0.0
    %1290 = vmatprep.subr.mxu0 0.0
    %1291 = vmatpush1.msra.mxu0 0.0
    %1292 = vmatprep.subr.mxu0 0.0
    %1293 = vmatpush1.msra.mxu0 0.0
    %1294 = vmatprep.subr.mxu0 0.0
    %1295 = vmatpush1.msra.mxu0 0.0
    %1296 = vmatprep.subr.mxu0 0.0
    %1297 = vmatpush1.msra.mxu0 0.0
    %1298 = vmatprep.subr.mxu0 0.0
    %1299 = vmatpush1.msra.mxu0 0.0
    %1300 = vmatprep.subr.mxu0 0.0
    %1301 = vmatpush1.msra.mxu0 0.0
    %1302 = vmatprep.subr.mxu0 0.0
    %1303 = vmatpush1.msra.mxu0 0.0
    %1304 = vmatprep.subr.mxu0 0.0
    %1305 = vmatpush1.msra.mxu0 0.0
    %1306 = vmatprep.subr.mxu0 0.0
    %1307 = vmatpush1.msra.mxu0 0.0
    %1308 = vmatprep.subr.mxu0 0.0
    %1309 = vmatpush1.msra.mxu0 0.0
    %1310 = vmatprep.subr.mxu0 0.0
    %1311 = vmatpush1.msra.mxu0 0.0
    %1312 = vmatprep.subr.mxu0 0.0
    %1313 = vmatpush1.msra.mxu0 0.0
    %1314 = vmatprep.subr.mxu0 0.0
    %1315 = vmatpush1.msra.mxu0 0.0
    %1316 = vmatprep.subr.mxu0 0.0
    %1317 = vmatpush1.msra.mxu0 0.0
    %1318 = vmatprep.subr.mxu0 0.0
    %1319 = vmatpush1.msra.mxu0 0.0
    %1320 = vmatprep.mubr.f32.mxu0 0.0
    %1321 = vmatmul.mubr.f32.gmra.mrb[0].mxu0 %v75
    %v1322 = vpop.f32.mrb[0].mxu0
    %v1323 = vadd.f32 0.0, %v1322
    %v1324 = vpop.f32.mrb[0].mxu0
    %1325 = vdwg.mxu0
    %v1326 = vadd.f32 %v691, %v1323
    %1327 = vmatprep.subr.mxu0 0.0
    %1328 = vmatpush1.msra.mxu0 %v1130
    %1329 = vmatprep.subr.mxu0 0.0
    %1330 = vmatpush1.msra.mxu0 %v1133
    %1331 = vmatprep.subr.mxu0 0.0
    %1332 = vmatpush1.msra.mxu0 %v1138
    %1333 = vmatprep.subr.mxu0 0.0
    %1334 = vmatpush1.msra.mxu0 %v1141
    %1335 = vmatprep.subr.mxu0 0.0
    %1336 = vmatpush1.msra.mxu0 %v1146
    %1337 = vmatprep.subr.mxu0 0.0
    %1338 = vmatpush1.msra.mxu0 %v1149
    %1339 = vmatprep.subr.mxu0 0.0
    %1340 = vmatpush1.msra.mxu0 %v1154
    %1341 = vmatprep.subr.mxu0 0.0
    %1342 = vmatpush1.msra.mxu0 %v1157
    %1343 = vmatprep.subr.mxu0 0.0
    %1344 = vmatpush1.msra.mxu0 %v1162
    %1345 = vmatprep.subr.mxu0 0.0
    %1346 = vmatpush1.msra.mxu0 %v1165
    %1347 = vmatprep.subr.mxu0 0.0
    %1348 = vmatpush1.msra.mxu0 %v1170
    %1349 = vmatprep.subr.mxu0 0.0
    %1350 = vmatpush1.msra.mxu0 %v1173
    %1351 = vmatprep.subr.mxu0 0.0
    %1352 = vmatpush1.msra.mxu0 %v1178
    %1353 = vmatprep.subr.mxu0 0.0
    %1354 = vmatpush1.msra.mxu0 %v1181
    %1355 = vmatprep.subr.mxu0 0.0
    %1356 = vmatpush1.msra.mxu0 %v1186
    %1357 = vmatprep.subr.mxu0 0.0
    %1358 = vmatpush1.msra.mxu0 %v1189
    %1359 = vmatprep.subr.mxu0 0.0
    %1360 = vmatpush1.msra.mxu0 %v1194
    %1361 = vmatprep.subr.mxu0 0.0
    %1362 = vmatpush1.msra.mxu0 %v1197
    %1363 = vmatprep.subr.mxu0 0.0
    %1364 = vmatpush1.msra.mxu0 %v1202
    %1365 = vmatprep.subr.mxu0 0.0
    %1366 = vmatpush1.msra.mxu0 %v1205
    %1367 = vmatprep.subr.mxu0 0.0
    %1368 = vmatpush1.msra.mxu0 %v1210
    %1369 = vmatprep.subr.mxu0 0.0
    %1370 = vmatpush1.msra.mxu0 %v1213
    %1371 = vmatprep.subr.mxu0 0.0
    %1372 = vmatpush1.msra.mxu0 %v1218
    %1373 = vmatprep.subr.mxu0 0.0
    %1374 = vmatpush1.msra.mxu0 %v1221
    %1375 = vmatprep.subr.mxu0 0.0
    %1376 = vmatpush1.msra.mxu0 %v1226
    %1377 = vmatprep.subr.mxu0 0.0
    %1378 = vmatpush1.msra.mxu0 %v1229
    %1379 = vmatprep.subr.mxu0 0.0
    %1380 = vmatpush1.msra.mxu0 %v1234
    %1381 = vmatprep.subr.mxu0 0.0
    %1382 = vmatpush1.msra.mxu0 %v1237
    %1383 = vmatprep.subr.mxu0 0.0
    %1384 = vmatpush1.msra.mxu0 %v1242
    %1385 = vmatprep.subr.mxu0 0.0
    %1386 = vmatpush1.msra.mxu0 %v1245
    %1387 = vmatprep.subr.mxu0 0.0
    %1388 = vmatpush1.msra.mxu0 %v1250
    %1389 = vmatprep.subr.mxu0 0.0
    %1390 = vmatpush1.msra.mxu0 %v1253
    %1391 = vmatprep.mubr.f32.mxu0 %v85
    %1392 = vmatmul.mubr.f32.gmra.mrb[0].mxu0 %v84
    %v1393 = vpop.f32.mrb[0].mxu0
    %v1394 = vadd.f32 0.0, %v1393
    %v1395 = vpop.f32.mrb[0].mxu0
    %1396 = vdwg.mxu0
    %v1397 = vadd.f32 %v831, %v1394
    %1398 = vmatprep.subr.mxu0 0.0
    %1399 = vmatpush1.msra.mxu0 %v1130
    %1400 = vmatprep.subr.mxu0 0.0
    %1401 = vmatpush1.msra.mxu0 %v1133
    %1402 = vmatprep.subr.mxu0 0.0
    %1403 = vmatpush1.msra.mxu0 %v1138
    %1404 = vmatprep.subr.mxu0 0.0
    %1405 = vmatpush1.msra.mxu0 %v1141
    %1406 = vmatprep.subr.mxu0 0.0
    %1407 = vmatpush1.msra.mxu0 %v1146
    %1408 = vmatprep.subr.mxu0 0.0
    %1409 = vmatpush1.msra.mxu0 %v1149
    %1410 = vmatprep.subr.mxu0 0.0
    %1411 = vmatpush1.msra.mxu0 %v1154
    %1412 = vmatprep.subr.mxu0 0.0
    %1413 = vmatpush1.msra.mxu0 %v1157
    %1414 = vmatprep.subr.mxu0 0.0
    %1415 = vmatpush1.msra.mxu0 %v1162
    %1416 = vmatprep.subr.mxu0 0.0
    %1417 = vmatpush1.msra.mxu0 %v1165
    %1418 = vmatprep.subr.mxu0 0.0
    %1419 = vmatpush1.msra.mxu0 %v1170
    %1420 = vmatprep.subr.mxu0 0.0
    %1421 = vmatpush1.msra.mxu0 %v1173
    %1422 = vmatprep.subr.mxu0 0.0
    %1423 = vmatpush1.msra.mxu0 %v1178
    %1424 = vmatprep.subr.mxu0 0.0
    %1425 = vmatpush1.msra.mxu0 %v1181
    %1426 = vmatprep.subr.mxu0 0.0
    %1427 = vmatpush1.msra.mxu0 %v1186
    %1428 = vmatprep.subr.mxu0 0.0
    %1429 = vmatpush1.msra.mxu0 %v1189
    %1430 = vmatprep.subr.mxu0 0.0
    %1431 = vmatpush1.msra.mxu0 %v1194
    %1432 = vmatprep.subr.mxu0 0.0
    %1433 = vmatpush1.msra.mxu0 %v1197
    %1434 = vmatprep.subr.mxu0 0.0
    %1435 = vmatpush1.msra.mxu0 %v1202
    %1436 = vmatprep.subr.mxu0 0.0
    %1437 = vmatpush1.msra.mxu0 %v1205
    %1438 = vmatprep.subr.mxu0 0.0
    %1439 = vmatpush1.msra.mxu0 %v1210
    %1440 = vmatprep.subr.mxu0 0.0
    %1441 = vmatpush1.msra.mxu0 %v1213
    %1442 = vmatprep.subr.mxu0 0.0
    %1443 = vmatpush1.msra.mxu0 %v1218
    %1444 = vmatprep.subr.mxu0 0.0
    %1445 = vmatpush1.msra.mxu0 %v1221
    %1446 = vmatprep.subr.mxu0 0.0
    %1447 = vmatpush1.msra.mxu0 %v1226
    %1448 = vmatprep.subr.mxu0 0.0
    %1449 = vmatpush1.msra.mxu0 %v1229
    %1450 = vmatprep.subr.mxu0 0.0
    %1451 = vmatpush1.msra.mxu0 %v1234
    %1452 = vmatprep.subr.mxu0 0.0
    %1453 = vmatpush1.msra.mxu0 %v1237
    %1454 = vmatprep.subr.mxu0 0.0
    %1455 = vmatpush1.msra.mxu0 %v1242
    %1456 = vmatprep.subr.mxu0 0.0
    %1457 = vmatpush1.msra.mxu0 %v1245
    %1458 = vmatprep.subr.mxu0 0.0
    %1459 = vmatpush1.msra.mxu0 %v1250
    %1460 = vmatprep.subr.mxu0 0.0
    %1461 = vmatpush1.msra.mxu0 %v1253
    %1462 = vmatprep.mubr.f32.mxu0 %v95
    %1463 = vmatmul.mubr.f32.gmra.mrb[0].mxu0 %v94
    %v1464 = vpop.f32.mrb[0].mxu0
    %v1465 = vadd.f32 0.0, %v1464
    %v1466 = vpop.f32.mrb[0].mxu0
    %1467 = vdwg.mxu0
    %v1468 = vadd.f32 %v971, %v1465
    %v1469 = vpack.c.bf16 %v1036, %v1033
    %v1470 = vpack.c.bf16 %v1044, %v1041
    %v1471 = vpack.c.bf16 %v1052, %v1049
    %v1472 = vpack.c.bf16 %v1060, %v1057
    %v1473 = vpack.c.bf16 %v1068, %v1065
    %v1474 = vpack.c.bf16 %v1076, %v1073
    %v1475 = vpack.c.bf16 %v1084, %v1081
    %v1476 = vpack.c.bf16 %v1092, %v1089
    %v1477 = vpack.c.bf16 %v1133, %v1130
    %v1478 = vpack.c.bf16 %v1141, %v1138
    %v1479 = vpack.c.bf16 %v1149, %v1146
    %v1480 = vpack.c.bf16 %v1157, %v1154
    %v1481 = vpack.c.bf16 %v1165, %v1162
    %v1482 = vpack.c.bf16 %v1173, %v1170
    %v1483 = vpack.c.bf16 %v1181, %v1178
    %v1484 = vpack.c.bf16 %v1189, %v1186
    %v1485 = vpack.c.bf16 %v1197, %v1194
    %v1486 = vpack.c.bf16 %v1205, %v1202
    %v1487 = vpack.c.bf16 %v1213, %v1210
    %v1488 = vpack.c.bf16 %v1221, %v1218
    %v1489 = vpack.c.bf16 %v1229, %v1226
    %v1490 = vpack.c.bf16 %v1237, %v1234
    %v1491 = vpack.c.bf16 %v1245, %v1242
    %v1492 = vpack.c.bf16 %v1253, %v1250
    %1493 = vmatprep.subr.bf16.mxu0 0
    %1494 = vmatpush1.bf16.msra.mxu0 %v1477
    %1495 = vmatprep.subr.bf16.mxu0 0
    %1496 = vmatpush1.bf16.msra.mxu0 %v1478
    %1497 = vmatprep.subr.bf16.mxu0 0
    %1498 = vmatpush1.bf16.msra.mxu0 %v1479
    %1499 = vmatprep.subr.bf16.mxu0 0
    %1500 = vmatpush1.bf16.msra.mxu0 %v1480
    %1501 = vmatprep.subr.bf16.mxu0 0
    %1502 = vmatpush1.bf16.msra.mxu0 %v1481
    %1503 = vmatprep.subr.bf16.mxu0 0
    %1504 = vmatpush1.bf16.msra.mxu0 %v1482
    %1505 = vmatprep.subr.bf16.mxu0 0
    %1506 = vmatpush1.bf16.msra.mxu0 %v1483
    %1507 = vmatprep.subr.bf16.mxu0 0
    %1508 = vmatpush1.bf16.msra.mxu0 %v1484
    %1509 = vmatprep.subr.bf16.mxu0 0
    %1510 = vmatpush1.bf16.msra.mxu0 %v1485
    %1511 = vmatprep.subr.bf16.mxu0 0
    %1512 = vmatpush1.bf16.msra.mxu0 %v1486
    %1513 = vmatprep.subr.bf16.mxu0 0
    %1514 = vmatpush1.bf16.msra.mxu0 %v1487
    %1515 = vmatprep.subr.bf16.mxu0 0
    %1516 = vmatpush1.bf16.msra.mxu0 %v1488
    %1517 = vmatprep.subr.bf16.mxu0 0
    %1518 = vmatpush1.bf16.msra.mxu0 %v1489
    %1519 = vmatprep.subr.bf16.mxu0 0
    %1520 = vmatpush1.bf16.msra.mxu0 %v1490
    %1521 = vmatprep.subr.bf16.mxu0 0
    %1522 = vmatpush1.bf16.msra.mxu0 %v1491
    %1523 = vmatprep.subr.bf16.mxu0 0
    %1524 = vmatpush1.bf16.msra.mxu0 %v1492
    %1525 = vmatprep.mubr.bf16.mxu0 %v233
    %1526 = vmatmul.mubr.bf16.gmra.mrb[0].mxu0 %v232
    %v1527 = vpop.f32.mrb[0].mxu0
    %v1528 = vadd.f32 0.0, %v1527
    %v1529 = vpop.f32.mrb[0].mxu0
    %v1530 = vpop.f32.mrb[0].mxu0
    %v1531 = vadd.f32 0.0, %v1530
    %v1532 = vpop.f32.mrb[0].mxu0
    %1533 = vmatprep.mubr.bf16.mxu0 %v235
    %1534 = vmatmul.mubr.bf16.gmra.mrb[0].mxu0 %v234
    %v1535 = vpop.f32.mrb[0].mxu0
    %v1536 = vadd.f32 0.0, %v1535
    %v1537 = vpop.f32.mrb[0].mxu0
    %v1538 = vpop.f32.mrb[0].mxu0
    %v1539 = vadd.f32 0.0, %v1538
    %v1540 = vpop.f32.mrb[0].mxu0
    %1541 = vmatprep.mubr.bf16.mxu0 %v237
    %1542 = vmatmul.mubr.bf16.gmra.mrb[0].mxu0 %v236
    %v1543 = vpop.f32.mrb[0].mxu0
    %v1544 = vadd.f32 0.0, %v1543
    %v1545 = vpop.f32.mrb[0].mxu0
    %v1546 = vpop.f32.mrb[0].mxu0
    %v1547 = vadd.f32 0.0, %v1546
    %v1548 = vpop.f32.mrb[0].mxu0
    %1549 = vmatprep.mubr.bf16.mxu0 %v239
    %1550 = vmatmul.mubr.bf16.gmra.mrb[0].mxu0 %v238
    %v1551 = vpop.f32.mrb[0].mxu0
    %v1552 = vadd.f32 0.0, %v1551
    %v1553 = vpop.f32.mrb[0].mxu0
    %v1554 = vpop.f32.mrb[0].mxu0
    %v1555 = vadd.f32 0.0, %v1554
    %v1556 = vpop.f32.mrb[0].mxu0
    %1557 = vmatprep.mubr.bf16.mxu0 %v241
    %1558 = vmatmul.mubr.bf16.gmra.mrb[0].mxu0 %v240
    %v1559 = vpop.f32.mrb[0].mxu0
    %v1560 = vadd.f32 0.0, %v1559
    %v1561 = vpop.f32.mrb[0].mxu0
    %v1562 = vpop.f32.mrb[0].mxu0
    %v1563 = vadd.f32 0.0, %v1562
    %v1564 = vpop.f32.mrb[0].mxu0
    %1565 = vmatprep.mubr.bf16.mxu0 %v243
    %1566 = vmatmul.mubr.bf16.gmra.mrb[0].mxu0 %v242
    %v1567 = vpop.f32.mrb[0].mxu0
    %v1568 = vadd.f32 0.0, %v1567
    %v1569 = vpop.f32.mrb[0].mxu0
    %v1570 = vpop.f32.mrb[0].mxu0
    %v1571 = vadd.f32 0.0, %v1570
    %v1572 = vpop.f32.mrb[0].mxu0
    %1573 = vmatprep.mubr.bf16.mxu0 %v245
    %1574 = vmatmul.mubr.bf16.gmra.mrb[0].mxu0 %v244
    %v1575 = vpop.f32.mrb[0].mxu0
    %v1576 = vadd.f32 0.0, %v1575
    %v1577 = vpop.f32.mrb[0].mxu0
    %v1578 = vpop.f32.mrb[0].mxu0
    %v1579 = vadd.f32 0.0, %v1578
    %v1580 = vpop.f32.mrb[0].mxu0
    %1581 = vmatprep.mubr.bf16.mxu0 %v247
    %1582 = vmatmul.mubr.bf16.gmra.mrb[0].mxu0 %v246
    %v1583 = vpop.f32.mrb[0].mxu0
    %v1584 = vadd.f32 0.0, %v1583
    %v1585 = vpop.f32.mrb[0].mxu0
    %v1586 = vpop.f32.mrb[0].mxu0
    %v1587 = vadd.f32 0.0, %v1586
    %v1588 = vpop.f32.mrb[0].mxu0
    %1589 = vdwg.mxu0
    %1590 = vmatprep.subr.bf16.mxu0 0
    %1591 = vmatpush1.bf16.msra.mxu0 %v1469
    %1592 = vmatprep.subr.bf16.mxu0 0
    %1593 = vmatpush1.bf16.msra.mxu0 %v1470
    %1594 = vmatprep.subr.bf16.mxu0 0
    %1595 = vmatpush1.bf16.msra.mxu0 %v1471
    %1596 = vmatprep.subr.bf16.mxu0 0
    %1597 = vmatpush1.bf16.msra.mxu0 %v1472
    %1598 = vmatprep.subr.bf16.mxu0 0
    %1599 = vmatpush1.bf16.msra.mxu0 %v1473
    %1600 = vmatprep.subr.bf16.mxu0 0
    %1601 = vmatpush1.bf16.msra.mxu0 %v1474
    %1602 = vmatprep.subr.bf16.mxu0 0
    %1603 = vmatpush1.bf16.msra.mxu0 %v1475
    %1604 = vmatprep.subr.bf16.mxu0 0
    %1605 = vmatpush1.bf16.msra.mxu0 %v1476
    %1606 = vmatprep.subr.bf16.mxu0 0
    %1607 = vmatpush1.bf16.msra.mxu0 0
    %1608 = vmatprep.subr.bf16.mxu0 0
    %1609 = vmatpush1.bf16.msra.mxu0 0
    %1610 = vmatprep.subr.bf16.mxu0 0
    %1611 = vmatpush1.bf16.msra.mxu0 0
    %1612 = vmatprep.subr.bf16.mxu0 0
    %1613 = vmatpush1.bf16.msra.mxu0 0
    %1614 = vmatprep.subr.bf16.mxu0 0
    %1615 = vmatpush1.bf16.msra.mxu0 0
    %1616 = vmatprep.subr.bf16.mxu0 0
    %1617 = vmatpush1.bf16.msra.mxu0 0
    %1618 = vmatprep.subr.bf16.mxu0 0
    %1619 = vmatpush1.bf16.msra.mxu0 0
    %1620 = vmatprep.subr.bf16.mxu0 0
    %1621 = vmatpush1.bf16.msra.mxu0 0
    %1622 = vmatprep.mubr.bf16.mxu0 0
    %1623 = vmatmul.mubr.bf16.gmra.mrb[0].mxu0 %v369
    %v1624 = vpop.f32.mrb[0].mxu0
    %v1625 = vadd.f32 0.0, %v1624
    %v1626 = vpop.f32.mrb[0].mxu0
    %v1627 = vpop.f32.mrb[0].mxu0
    %v1628 = vadd.f32 0.0, %v1627
    %v1629 = vpop.f32.mrb[0].mxu0
    %1630 = vmatprep.mubr.bf16.mxu0 0
    %1631 = vmatmul.mubr.bf16.gmra.mrb[0].mxu0 %v370
    %v1632 = vpop.f32.mrb[0].mxu0
    %v1633 = vadd.f32 0.0, %v1632
    %v1634 = vpop.f32.mrb[0].mxu0
    %v1635 = vpop.f32.mrb[0].mxu0
    %v1636 = vadd.f32 0.0, %v1635
    %v1637 = vpop.f32.mrb[0].mxu0
    %1638 = vmatprep.mubr.bf16.mxu0 0
    %1639 = vmatmul.mubr.bf16.gmra.mrb[0].mxu0 %v371
    %v1640 = vpop.f32.mrb[0].mxu0
    %v1641 = vadd.f32 0.0, %v1640
    %v1642 = vpop.f32.mrb[0].mxu0
    %v1643 = vpop.f32.mrb[0].mxu0
    %v1644 = vadd.f32 0.0, %v1643
    %v1645 = vpop.f32.mrb[0].mxu0
    %1646 = vmatprep.mubr.bf16.mxu0 0
    %1647 = vmatmul.mubr.bf16.gmra.mrb[0].mxu0 %v372
    %v1648 = vpop.f32.mrb[0].mxu0
    %v1649 = vadd.f32 0.0, %v1648
    %v1650 = vpop.f32.mrb[0].mxu0
    %v1651 = vpop.f32.mrb[0].mxu0
    %v1652 = vadd.f32 0.0, %v1651
    %v1653 = vpop.f32.mrb[0].mxu0
    %1654 = vmatprep.mubr.bf16.mxu0 0
    %1655 = vmatmul.mubr.bf16.gmra.mrb[0].mxu0 %v373
    %v1656 = vpop.f32.mrb[0].mxu0
    %v1657 = vadd.f32 0.0, %v1656
    %v1658 = vpop.f32.mrb[0].mxu0
    %v1659 = vpop.f32.mrb[0].mxu0
    %v1660 = vadd.f32 0.0, %v1659
    %v1661 = vpop.f32.mrb[0].mxu0
    %1662 = vmatprep.mubr.bf16.mxu0 0
    %1663 = vmatmul.mubr.bf16.gmra.mrb[0].mxu0 %v374
    %v1664 = vpop.f32.mrb[0].mxu0
    %v1665 = vadd.f32 0.0, %v1664
    %v1666 = vpop.f32.mrb[0].mxu0
    %v1667 = vpop.f32.mrb[0].mxu0
    %v1668 = vadd.f32 0.0, %v1667
    %v1669 = vpop.f32.mrb[0].mxu0
    %1670 = vmatprep.mubr.bf16.mxu0 0
    %1671 = vmatmul.mubr.bf16.gmra.mrb[0].mxu0 %v375
    %v1672 = vpop.f32.mrb[0].mxu0
    %v1673 = vadd.f32 0.0, %v1672
    %v1674 = vpop.f32.mrb[0].mxu0
    %v1675 = vpop.f32.mrb[0].mxu0
    %v1676 = vadd.f32 0.0, %v1675
    %v1677 = vpop.f32.mrb[0].mxu0
    %1678 = vmatprep.mubr.bf16.mxu0 0
    %1679 = vmatmul.mubr.bf16.gmra.mrb[0].mxu0 %v376
    %v1680 = vpop.f32.mrb[0].mxu0
    %v1681 = vadd.f32 0.0, %v1680
    %v1682 = vpop.f32.mrb[0].mxu0
    %v1683 = vpop.f32.mrb[0].mxu0
    %v1684 = vadd.f32 0.0, %v1683
    %v1685 = vpop.f32.mrb[0].mxu0
    %1686 = vmatprep.mubr.bf16.mxu0 0
    %1687 = vmatmul.mubr.bf16.gmra.mrb[0].mxu0 %v385
    %v1688 = vpop.f32.mrb[0].mxu0
    %v1689 = vadd.f32 0.0, %v1688
    %v1690 = vpop.f32.mrb[0].mxu0
    %v1691 = vpop.f32.mrb[0].mxu0
    %v1692 = vadd.f32 0.0, %v1691
    %v1693 = vpop.f32.mrb[0].mxu0
    %1694 = vmatprep.mubr.bf16.mxu0 0
    %1695 = vmatmul.mubr.bf16.gmra.mrb[0].mxu0 %v386
    %v1696 = vpop.f32.mrb[0].mxu0
    %v1697 = vadd.f32 0.0, %v1696
    %v1698 = vpop.f32.mrb[0].mxu0
    %v1699 = vpop.f32.mrb[0].mxu0
    %v1700 = vadd.f32 0.0, %v1699
    %v1701 = vpop.f32.mrb[0].mxu0
    %1702 = vmatprep.mubr.bf16.mxu0 0
    %1703 = vmatmul.mubr.bf16.gmra.mrb[0].mxu0 %v387
    %v1704 = vpop.f32.mrb[0].mxu0
    %v1705 = vadd.f32 0.0, %v1704
    %v1706 = vpop.f32.mrb[0].mxu0
    %v1707 = vpop.f32.mrb[0].mxu0
    %v1708 = vadd.f32 0.0, %v1707
    %v1709 = vpop.f32.mrb[0].mxu0
    %1710 = vmatprep.mubr.bf16.mxu0 0
    %1711 = vmatmul.mubr.bf16.gmra.mrb[0].mxu0 %v388
    %v1712 = vpop.f32.mrb[0].mxu0
    %v1713 = vadd.f32 0.0, %v1712
    %v1714 = vpop.f32.mrb[0].mxu0
    %v1715 = vpop.f32.mrb[0].mxu0
    %v1716 = vadd.f32 0.0, %v1715
    %v1717 = vpop.f32.mrb[0].mxu0
    %1718 = vmatprep.mubr.bf16.mxu0 0
    %1719 = vmatmul.mubr.bf16.gmra.mrb[0].mxu0 %v389
    %v1720 = vpop.f32.mrb[0].mxu0
    %v1721 = vadd.f32 0.0, %v1720
    %v1722 = vpop.f32.mrb[0].mxu0
    %v1723 = vpop.f32.mrb[0].mxu0
    %v1724 = vadd.f32 0.0, %v1723
    %v1725 = vpop.f32.mrb[0].mxu0
    %1726 = vmatprep.mubr.bf16.mxu0 0
    %1727 = vmatmul.mubr.bf16.gmra.mrb[0].mxu0 %v390
    %v1728 = vpop.f32.mrb[0].mxu0
    %v1729 = vadd.f32 0.0, %v1728
    %v1730 = vpop.f32.mrb[0].mxu0
    %v1731 = vpop.f32.mrb[0].mxu0
    %v1732 = vadd.f32 0.0, %v1731
    %v1733 = vpop.f32.mrb[0].mxu0
    %1734 = vmatprep.mubr.bf16.mxu0 0
    %1735 = vmatmul.mubr.bf16.gmra.mrb[0].mxu0 %v391
    %v1736 = vpop.f32.mrb[0].mxu0
    %v1737 = vadd.f32 0.0, %v1736
    %v1738 = vpop.f32.mrb[0].mxu0
    %v1739 = vpop.f32.mrb[0].mxu0
    %v1740 = vadd.f32 0.0, %v1739
    %v1741 = vpop.f32.mrb[0].mxu0
    %1742 = vmatprep.mubr.bf16.mxu0 0
    %1743 = vmatmul.mubr.bf16.gmra.mrb[0].mxu0 %v392
    %v1744 = vpop.f32.mrb[0].mxu0
    %v1745 = vadd.f32 0.0, %v1744
    %v1746 = vpop.f32.mrb[0].mxu0
    %v1747 = vpop.f32.mrb[0].mxu0
    %v1748 = vadd.f32 0.0, %v1747
    %v1749 = vpop.f32.mrb[0].mxu0
    %1750 = vdwg.mxu0
    %1751 = vmatprep.subr.mxu0 0.0
    %1752 = vmatpush1.msra.mxu0 %v1528
    %1753 = vmatprep.subr.mxu0 0.0
    %1754 = vmatpush1.msra.mxu0 %v1531
    %1755 = vmatprep.subr.mxu0 0.0
    %1756 = vmatpush1.msra.mxu0 %v1536
    %1757 = vmatprep.subr.mxu0 0.0
    %1758 = vmatpush1.msra.mxu0 %v1539
    %1759 = vmatprep.subr.mxu0 0.0
    %1760 = vmatpush1.msra.mxu0 %v1544
    %1761 = vmatprep.subr.mxu0 0.0
    %1762 = vmatpush1.msra.mxu0 %v1547
    %1763 = vmatprep.subr.mxu0 0.0
    %1764 = vmatpush1.msra.mxu0 %v1552
    %1765 = vmatprep.subr.mxu0 0.0
    %1766 = vmatpush1.msra.mxu0 %v1555
    %1767 = vmatprep.subr.mxu0 0.0
    %1768 = vmatpush1.msra.mxu0 %v1560
    %1769 = vmatprep.subr.mxu0 0.0
    %1770 = vmatpush1.msra.mxu0 %v1563
    %1771 = vmatprep.subr.mxu0 0.0
    %1772 = vmatpush1.msra.mxu0 %v1568
    %1773 = vmatprep.subr.mxu0 0.0
    %1774 = vmatpush1.msra.mxu0 %v1571
    %1775 = vmatprep.subr.mxu0 0.0
    %1776 = vmatpush1.msra.mxu0 %v1576
    %1777 = vmatprep.subr.mxu0 0.0
    %1778 = vmatpush1.msra.mxu0 %v1579
    %1779 = vmatprep.subr.mxu0 0.0
    %1780 = vmatpush1.msra.mxu0 %v1584
    %1781 = vmatprep.subr.mxu0 0.0
    %1782 = vmatpush1.msra.mxu0 %v1587
    %1783 = vmatprep.subr.mxu0 0.0
    %1784 = vmatpush1.msra.mxu0 0.0
    %1785 = vmatprep.subr.mxu0 0.0
    %1786 = vmatpush1.msra.mxu0 0.0
    %1787 = vmatprep.subr.mxu0 0.0
    %1788 = vmatpush1.msra.mxu0 0.0
    %1789 = vmatprep.subr.mxu0 0.0
    %1790 = vmatpush1.msra.mxu0 0.0
    %1791 = vmatprep.subr.mxu0 0.0
    %1792 = vmatpush1.msra.mxu0 0.0
    %1793 = vmatprep.subr.mxu0 0.0
    %1794 = vmatpush1.msra.mxu0 0.0
    %1795 = vmatprep.subr.mxu0 0.0
    %1796 = vmatpush1.msra.mxu0 0.0
    %1797 = vmatprep.subr.mxu0 0.0
    %1798 = vmatpush1.msra.mxu0 0.0
    %1799 = vmatprep.subr.mxu0 0.0
    %1800 = vmatpush1.msra.mxu0 0.0
    %1801 = vmatprep.subr.mxu0 0.0
    %1802 = vmatpush1.msra.mxu0 0.0
    %1803 = vmatprep.subr.mxu0 0.0
    %1804 = vmatpush1.msra.mxu0 0.0
    %1805 = vmatprep.subr.mxu0 0.0
    %1806 = vmatpush1.msra.mxu0 0.0
    %1807 = vmatprep.subr.mxu0 0.0
    %1808 = vmatpush1.msra.mxu0 0.0
    %1809 = vmatprep.subr.mxu0 0.0
    %1810 = vmatpush1.msra.mxu0 0.0
    %1811 = vmatprep.subr.mxu0 0.0
    %1812 = vmatpush1.msra.mxu0 0.0
    %1813 = vmatprep.subr.mxu0 0.0
    %1814 = vmatpush1.msra.mxu0 0.0
    %1815 = vmatprep.mubr.f32.mxu0 0.0
    %1816 = vmatmul.mubr.f32.gmra.mrb[0].mxu0 %v75
    %v1817 = vpop.f32.mrb[0].mxu0
    %v1818 = vadd.f32 0.0, %v1817
    %v1819 = vpop.f32.mrb[0].mxu0
    %1820 = vdwg.mxu0
    %v1821 = vadd.f32 %v1326, %v1818
    %1822 = vmatprep.subr.mxu0 0.0
    %1823 = vmatpush1.msra.mxu0 %v1625
    %1824 = vmatprep.subr.mxu0 0.0
    %1825 = vmatpush1.msra.mxu0 %v1628
    %1826 = vmatprep.subr.mxu0 0.0
    %1827 = vmatpush1.msra.mxu0 %v1633
    %1828 = vmatprep.subr.mxu0 0.0
    %1829 = vmatpush1.msra.mxu0 %v1636
    %1830 = vmatprep.subr.mxu0 0.0
    %1831 = vmatpush1.msra.mxu0 %v1641
    %1832 = vmatprep.subr.mxu0 0.0
    %1833 = vmatpush1.msra.mxu0 %v1644
    %1834 = vmatprep.subr.mxu0 0.0
    %1835 = vmatpush1.msra.mxu0 %v1649
    %1836 = vmatprep.subr.mxu0 0.0
    %1837 = vmatpush1.msra.mxu0 %v1652
    %1838 = vmatprep.subr.mxu0 0.0
    %1839 = vmatpush1.msra.mxu0 %v1657
    %1840 = vmatprep.subr.mxu0 0.0
    %1841 = vmatpush1.msra.mxu0 %v1660
    %1842 = vmatprep.subr.mxu0 0.0
    %1843 = vmatpush1.msra.mxu0 %v1665
    %1844 = vmatprep.subr.mxu0 0.0
    %1845 = vmatpush1.msra.mxu0 %v1668
    %1846 = vmatprep.subr.mxu0 0.0
    %1847 = vmatpush1.msra.mxu0 %v1673
    %1848 = vmatprep.subr.mxu0 0.0
    %1849 = vmatpush1.msra.mxu0 %v1676
    %1850 = vmatprep.subr.mxu0 0.0
    %1851 = vmatpush1.msra.mxu0 %v1681
    %1852 = vmatprep.subr.mxu0 0.0
    %1853 = vmatpush1.msra.mxu0 %v1684
    %1854 = vmatprep.subr.mxu0 0.0
    %1855 = vmatpush1.msra.mxu0 %v1689
    %1856 = vmatprep.subr.mxu0 0.0
    %1857 = vmatpush1.msra.mxu0 %v1692
    %1858 = vmatprep.subr.mxu0 0.0
    %1859 = vmatpush1.msra.mxu0 %v1697
    %1860 = vmatprep.subr.mxu0 0.0
    %1861 = vmatpush1.msra.mxu0 %v1700
    %1862 = vmatprep.subr.mxu0 0.0
    %1863 = vmatpush1.msra.mxu0 %v1705
    %1864 = vmatprep.subr.mxu0 0.0
    %1865 = vmatpush1.msra.mxu0 %v1708
    %1866 = vmatprep.subr.mxu0 0.0
    %1867 = vmatpush1.msra.mxu0 %v1713
    %1868 = vmatprep.subr.mxu0 0.0
    %1869 = vmatpush1.msra.mxu0 %v1716
    %1870 = vmatprep.subr.mxu0 0.0
    %1871 = vmatpush1.msra.mxu0 %v1721
    %1872 = vmatprep.subr.mxu0 0.0
    %1873 = vmatpush1.msra.mxu0 %v1724
    %1874 = vmatprep.subr.mxu0 0.0
    %1875 = vmatpush1.msra.mxu0 %v1729
    %1876 = vmatprep.subr.mxu0 0.0
    %1877 = vmatpush1.msra.mxu0 %v1732
    %1878 = vmatprep.subr.mxu0 0.0
    %1879 = vmatpush1.msra.mxu0 %v1737
    %1880 = vmatprep.subr.mxu0 0.0
    %1881 = vmatpush1.msra.mxu0 %v1740
    %1882 = vmatprep.subr.mxu0 0.0
    %1883 = vmatpush1.msra.mxu0 %v1745
    %1884 = vmatprep.subr.mxu0 0.0
    %1885 = vmatpush1.msra.mxu0 %v1748
    %1886 = vmatprep.mubr.f32.mxu0 %v85
    %1887 = vmatmul.mubr.f32.gmra.mrb[0].mxu0 %v84
    %v1888 = vpop.f32.mrb[0].mxu0
    %v1889 = vadd.f32 0.0, %v1888
    %v1890 = vpop.f32.mrb[0].mxu0
    %1891 = vdwg.mxu0
    %v1892 = vadd.f32 %v1397, %v1889
    %1893 = vmatprep.subr.mxu0 0.0
    %1894 = vmatpush1.msra.mxu0 %v1625
    %1895 = vmatprep.subr.mxu0 0.0
    %1896 = vmatpush1.msra.mxu0 %v1628
    %1897 = vmatprep.subr.mxu0 0.0
    %1898 = vmatpush1.msra.mxu0 %v1633
    %1899 = vmatprep.subr.mxu0 0.0
    %1900 = vmatpush1.msra.mxu0 %v1636
    %1901 = vmatprep.subr.mxu0 0.0
    %1902 = vmatpush1.msra.mxu0 %v1641
    %1903 = vmatprep.subr.mxu0 0.0
    %1904 = vmatpush1.msra.mxu0 %v1644
    %1905 = vmatprep.subr.mxu0 0.0
    %1906 = vmatpush1.msra.mxu0 %v1649
    %1907 = vmatprep.subr.mxu0 0.0
    %1908 = vmatpush1.msra.mxu0 %v1652
    %1909 = vmatprep.subr.mxu0 0.0
    %1910 = vmatpush1.msra.mxu0 %v1657
    %1911 = vmatprep.subr.mxu0 0.0
    %1912 = vmatpush1.msra.mxu0 %v1660
    %1913 = vmatprep.subr.mxu0 0.0
    %1914 = vmatpush1.msra.mxu0 %v1665
    %1915 = vmatprep.subr.mxu0 0.0
    %1916 = vmatpush1.msra.mxu0 %v1668
    %1917 = vmatprep.subr.mxu0 0.0
    %1918 = vmatpush1.msra.mxu0 %v1673
    %1919 = vmatprep.subr.mxu0 0.0
    %1920 = vmatpush1.msra.mxu0 %v1676
    %1921 = vmatprep.subr.mxu0 0.0
    %1922 = vmatpush1.msra.mxu0 %v1681
    %1923 = vmatprep.subr.mxu0 0.0
    %1924 = vmatpush1.msra.mxu0 %v1684
    %1925 = vmatprep.subr.mxu0 0.0
    %1926 = vmatpush1.msra.mxu0 %v1689
    %1927 = vmatprep.subr.mxu0 0.0
    %1928 = vmatpush1.msra.mxu0 %v1692
    %1929 = vmatprep.subr.mxu0 0.0
    %1930 = vmatpush1.msra.mxu0 %v1697
    %1931 = vmatprep.subr.mxu0 0.0
    %1932 = vmatpush1.msra.mxu0 %v1700
    %1933 = vmatprep.subr.mxu0 0.0
    %1934 = vmatpush1.msra.mxu0 %v1705
    %1935 = vmatprep.subr.mxu0 0.0
    %1936 = vmatpush1.msra.mxu0 %v1708
    %1937 = vmatprep.subr.mxu0 0.0
    %1938 = vmatpush1.msra.mxu0 %v1713
    %1939 = vmatprep.subr.mxu0 0.0
    %1940 = vmatpush1.msra.mxu0 %v1716
    %1941 = vmatprep.subr.mxu0 0.0
    %1942 = vmatpush1.msra.mxu0 %v1721
    %1943 = vmatprep.subr.mxu0 0.0
    %1944 = vmatpush1.msra.mxu0 %v1724
    %1945 = vmatprep.subr.mxu0 0.0
    %1946 = vmatpush1.msra.mxu0 %v1729
    %1947 = vmatprep.subr.mxu0 0.0
    %1948 = vmatpush1.msra.mxu0 %v1732
    %1949 = vmatprep.subr.mxu0 0.0
    %1950 = vmatpush1.msra.mxu0 %v1737
    %1951 = vmatprep.subr.mxu0 0.0
    %1952 = vmatpush1.msra.mxu0 %v1740
    %1953 = vmatprep.subr.mxu0 0.0
    %1954 = vmatpush1.msra.mxu0 %v1745
    %1955 = vmatprep.subr.mxu0 0.0
    %1956 = vmatpush1.msra.mxu0 %v1748
    %1957 = vmatprep.mubr.f32.mxu0 %v95
    %1958 = vmatmul.mubr.f32.gmra.mrb[0].mxu0 %v94
    %v1959 = vpop.f32.mrb[0].mxu0
    %v1960 = vadd.f32 0.0, %v1959
    %v1961 = vpop.f32.mrb[0].mxu0
    %1962 = vdwg.mxu0
    %v1963 = vadd.f32 %v1468, %v1960
    %v1964 = vmul.f32 %v1821, 0.25
    %v1965 = vmul.f32 %v1892, 0.25
    %v1966 = vmul.f32 %v1963, 0.25
    %v1967 = vmul.f32 %v1964, %v1965
    %1968 = vadd.xlane.f32.xlu0 %v1967
    %v1969 = vpop.xlane.xlu0 %1968
    %v1970 = vmul.f32 %v1964, %v1966
    %1971 = vadd.xlane.f32.xlu0 %v1970
    %v1972 = vpop.xlane.xlu0 %1971
    %v1973 = vsub.f32 %v1969, %v1972
    %v1974 = vmin.f32 %v1973, 0.0
    %v1975 = vand.u32 2147483647, %v1973
    %v1976 = vsub.f32 0.0, %v1975
    %v1977 = vmul.f32 %v1976, 1.442695
    %v1978 = vpow.pop %v1977
    %v1979 = vadd.f32 %v1978, 1.0
    %v1980 = vlog2.pop %v1979
    %v1981 = vmul.f32 %v1980, 0.6931472
    %v1982 = vsub.f32 %v1974, %v1981
    %vm1983 = vcmask 7168
    %v1984 = vsel %vm1983, %v1982, 0.0
    %1985 = vadd.xlane.f32.xlu0 %v1984
    %v1986 = vpop.xlane.xlu0 %1985
    %v1987 = vrot.slane %v1986, 4
    %v1988 = vadd.f32 %v1986, %v1987
    %v1989 = vrot.slane %v1988, 2
    %v1990 = vadd.f32 %v1988, %v1989
    %v1991 = vrot.slane %v1990, 1
    %v1992 = vadd.f32 %v1990, %v1991
    %s1993 = vtos %v1992
    %v1994 = vstv %s1993
    %v1995 = vsub.f32 0.0, %v1994
    %v1996 = vrcp.pop 8.0
    %v1997 = vmul.f32 %v1995, %v1996
    %v1998 = vmul.f32 %v1964, %v1964
    %1999 = vadd.xlane.f32.xlu0 %v1998
    %v2000 = vpop.xlane.xlu0 %1999
    %v2001 = vrot.slane %v2000, 4
    %v2002 = vadd.f32 %v2000, %v2001
    %v2003 = vrot.slane %v2002, 2
    %v2004 = vadd.f32 %v2002, %v2003
    %v2005 = vrot.slane %v2004, 1
    %v2006 = vadd.f32 %v2004, %v2005
    %s2007 = vtos %v2006
    %v2008 = vstv %s2007
    %v2009 = vmul.f32 %v1965, %v1965
    %2010 = vadd.xlane.f32.xlu0 %v2009
    %v2011 = vpop.xlane.xlu0 %2010
    %v2012 = vrot.slane %v2011, 4
    %v2013 = vadd.f32 %v2011, %v2012
    %v2014 = vrot.slane %v2013, 2
    %v2015 = vadd.f32 %v2013, %v2014
    %v2016 = vrot.slane %v2015, 1
    %v2017 = vadd.f32 %v2015, %v2016
    %s2018 = vtos %v2017
    %v2019 = vstv %s2018
    %v2020 = vadd.f32 %v2008, %v2019
    %v2021 = vmul.f32 %v1966, %v1966
    %2022 = vadd.xlane.f32.xlu0 %v2021
    %v2023 = vpop.xlane.xlu0 %2022
    %v2024 = vrot.slane %v2023, 4
    %v2025 = vadd.f32 %v2023, %v2024
    %v2026 = vrot.slane %v2025, 2
    %v2027 = vadd.f32 %v2025, %v2026
    %v2028 = vrot.slane %v2027, 1
    %v2029 = vadd.f32 %v2027, %v2028
    %s2030 = vtos %v2029
    %v2031 = vstv %s2030
    %v2032 = vadd.f32 %v2020, %v2031
    %v2033 = vmul.f32 %v2032, 0.0625
    %v2034 = vmul.f32 %v2033, 0.01
    %v2035 = vadd.f32 %v1997, %v2034
    %vm2036 = vcmask 0
    %2037 = vst.msk [vmem:[#allocation8] sm:$0x1] %vm2036, %v2035
    // Predicated region
    $region38: #{tpu_custom_call.1} parent=1 // pred_check
      _
    $region39: #{tpu_custom_call.1} parent=1 // pred_check_branch
      %2039 = sbr.rel (0) target = $region41
    $region40: #{tpu_custom_call.1} parent=1 // pred_region
      %s2041 = ssub.s32 16, 16
      %2042 = vsyncadd [#allocation4], %s2041
      %s2044 = sshll.u32 [#allocation8], 4
      %s2045 = int_to_ptr.vmem [resolvable:$true] %s2044
      %2047 = dma.vmem_to_hbm [thread:$0]  %s2045, 16, %s6, [#allocation4]
    $region41: #{tpu_custom_call.1} parent=1 // pred_fallthru
      _
    // Predicated region
    $region42: #{tpu_custom_call.1} parent=1 // pred_check
      _
    $region43: #{tpu_custom_call.1} parent=1 // pred_check_branch
      %2049 = sbr.rel (0) target = $region45
    $region44: #{tpu_custom_call.1} parent=1 // pred_region
      %2050 = dma.done [#allocation4], 16
    $region45: #{tpu_custom_call.1} parent=1 // pred_fallthru
      _
    %2051 = vsyncpa [#allocation3], 1
    %2052 = vsyncpa [#allocation6], 1
    %2053 = vsyncpa [#allocation4], 1

</llo_original>
